<compile_context>
chip_gen: v7x
topology: tpu7x:2x2x1
jax: 0.10.0
libtpu: 0.0.40
codegen_flags: <defaults>
</compile_context>

<pallas_src>
import functools
import math

import jax
import jax.numpy as jnp
from jax import lax
from jax.experimental import pallas as pl
from jax.experimental.pallas import tpu as pltpu


# -------------------------- generation-aware sizing ----------------------------

def _vmem_capacity_bytes():
    try:
        return int(pltpu.get_tpu_info().vmem_capacity_bytes)
    except Exception:
        return 64 * 1024 * 1024          # assume the smallest (v7x) if query fails


_VMEM_CAP = _vmem_capacity_bytes()
if _VMEM_CAP >= 128 * 1024 * 1024:        # v5e / v6e: 128 MiB physical VMEM
    _VMEM_LIMIT = 100 * 1024 * 1024
    _ROW_TILES = (1024, 512, 256, 128, 64, 32, 16, 8)
    _LANE_TILES = (1024, 512, 256, 128)
else:                                     # v7x: 64 MiB physical VMEM
    _VMEM_LIMIT = 48 * 1024 * 1024
    _ROW_TILES = (512, 256, 128, 64, 32, 16, 8)
    _LANE_TILES = (512, 256, 128)


def _cparams(semantics):
    return pltpu.CompilerParams(dimension_semantics=semantics,
                                vmem_limit_bytes=_VMEM_LIMIT)


def _pick_tile(dim, candidates):
    """Largest candidate that exactly divides dim, else the full dim."""
    for c in candidates:
        if dim >= c and dim % c == 0:
            return c
    return dim


def _seq_tile(S):
    """Sequence tile for (B, S, ...) kernels: 8-aligned divisor of S, else full S."""
    for c in _ROW_TILES:
        if S >= c and S % c == 0:
            return c
    return S


def _row_plan(M, bytes_per_row=0):
    """Pick a row tile (and a padded row count) for flattened (M, D) kernels.

    Awkward M gets padded up so the tile stays large; a rough per-row VMEM cost
    keeps the tile within the generation's VMEM budget (v7x ln_linear concern).
    """
    budget = _VMEM_LIMIT // 3
    cands = [c for c in _ROW_TILES
             if bytes_per_row == 0 or c * bytes_per_row <= budget]
    if not cands:
        cands = [8]
    for c in cands:
        if M >= c and M % c == 0:
            return c, M
    tm = next((c for c in cands if c <= M), cands[-1])
    Mp = -(-M // tm) * tm
    return tm, Mp


def _pad_rows(x2d, Mp):
    M = x2d.shape[0]
    if Mp == M:
        return x2d
    return jnp.pad(x2d, ((0, Mp - M), (0, 0)))


def _unpad_rows(x2d, M):
    return x2d if x2d.shape[0] == M else x2d[:M]


# ----------------------------- Pallas kernels ---------------------------------

def _head_proj_kernel(*refs, n_out, with_ln):
    # Fused (optional pre-LayerNorm) + per-head projection.  The normalized row
    # tile is computed once (head index 0) into a VMEM scratch and reused for every
    # head; outputs are written head-major (B, H, S, Dh) in bf16.
    idx = 0
    x_ref = refs[idx]; idx += 1
    if with_ln:
        g_ref = refs[idx]; b_ref = refs[idx + 1]; idx += 2
    wb = refs[idx: idx + 2 * n_out]; idx += 2 * n_out
    outs = refs[idx: idx + n_out]; idx += n_out
    xn_ref = refs[idx]

    @pl.when(pl.program_id(2) == 0)
    def _():
        xv = x_ref[0].astype(jnp.float32)                    # (ts, D)
        if with_ln:
            mu = jnp.mean(xv, axis=-1, keepdims=True)
            var = jnp.mean(jnp.square(xv - mu), axis=-1, keepdims=True)
            xv = (xv - mu) * lax.rsqrt(var + 1e-5) * g_ref[...] + b_ref[...]
        xn_ref[...] = xv.astype(jnp.bfloat16)

    xn = xn_ref[...]                                          # (ts, D) bf16
    for t in range(n_out):
        w = wb[2 * t][0]                                      # (D, Dh) bf16
        bias = wb[2 * t + 1][0]                               # (1, Dh) f32
        y = jnp.dot(xn, w, preferred_element_type=jnp.float32) + bias
        outs[t][0, 0] = y.astype(outs[t].dtype)


def _attn_out_kernel(*refs, has_res):
    # Output projection reading head-major attention output; heads are the K axis
    # and the f32 output block is the resident accumulator.  Bias (+ fused sublayer
    # residual) applied on the last head step.
    if has_res:
        o_ref, w_ref, b_ref, res_ref, out_ref = refs
    else:
        o_ref, w_ref, b_ref, out_ref = refs
    h = pl.program_id(3)

    @pl.when(h == 0)
    def _():
        out_ref[...] = jnp.zeros_like(out_ref)

    out_ref[0] += jnp.dot(o_ref[0, 0], w_ref[0],
                          preferred_element_type=jnp.float32)

    @pl.when(h == pl.num_programs(3) - 1)
    def _():
        y = out_ref[0] + b_ref[...]
        if has_res:
            y = y + res_ref[0]
        out_ref[0] = y


def _ln_linear_kernel(x_ref, g_ref, b_ref, w_ref, bias_ref, o_ref, xn_ref, *, relu):
    # Fused pre-LayerNorm + projection.  LN computed once per row tile (N-tile 0)
    # into a bf16 VMEM scratch, matmul runs on the MXU in bf16, f32 accumulation.
    @pl.when(pl.program_id(1) == 0)
    def _():
        x = x_ref[...]
        mu = jnp.mean(x, axis=-1, keepdims=True)
        var = jnp.mean(jnp.square(x - mu), axis=-1, keepdims=True)
        xn_ref[...] = ((x - mu) * lax.rsqrt(var + 1e-5) * g_ref[...]
                       + b_ref[...]).astype(jnp.bfloat16)

    y = jnp.dot(xn_ref[...], w_ref[...],
                preferred_element_type=jnp.float32) + bias_ref[...]
    if relu:
        y = jnp.maximum(y, 0.0)
    o_ref[...] = y.astype(o_ref.dtype)


def _linear_kernel(*refs, relu, has_res):
    # K-tiled matmul accumulating directly into the resident f32 output block;
    # bias (+ optional fused residual, ReLU) applied on the last K step.
    if has_res:
        x_ref, w_ref, b_ref, res_ref, o_ref = refs
    else:
        x_ref, w_ref, b_ref, o_ref = refs
    k = pl.program_id(2)

    @pl.when(k == 0)
    def _():
        o_ref[...] = jnp.zeros_like(o_ref)

    x = x_ref[...]
    if x.dtype != jnp.bfloat16:
        x = x.astype(jnp.bfloat16)
    o_ref[...] += jnp.dot(x, w_ref[...], preferred_element_type=jnp.float32)

    @pl.when(k == pl.num_programs(2) - 1)
    def _():
        y = o_ref[...] + b_ref[...]
        if has_res:
            y = y + res_ref[...]
        if relu:
            y = jnp.maximum(y, 0.0)
        o_ref[...] = y


def _adapter_kernel(x_ref, res_ref, wd_ref, bd_ref, wu_ref, bu_ref, o_ref):
    # Houlsby adapter with the outer sublayer residual fused:
    #   out = residual + x + up(relu(down(x))).  The (tm, A) bottleneck stays in VMEM.
    x = x_ref[...]
    h = jnp.dot(x.astype(jnp.bfloat16), wd_ref[...],
                preferred_element_type=jnp.float32) + bd_ref[...]
    h = jnp.maximum(h, 0.0)
    y = jnp.dot(h.astype(jnp.bfloat16), wu_ref[...],
                preferred_element_type=jnp.float32) + bu_ref[...]
    o_ref[...] = res_ref[...] + x + y


def _layernorm_kernel(x_ref, g_ref, b_ref, o_ref):
    x = x_ref[...]
    mu = jnp.mean(x, axis=-1, keepdims=True)
    var = jnp.mean(jnp.square(x - mu), axis=-1, keepdims=True)
    o_ref[...] = (x - mu) * lax.rsqrt(var + 1e-5) * g_ref[...] + b_ref[...]


def _flash_attn_kernel(*refs, causal, offset, has_mask):
    # Online-softmax attention over Sk tiles.  Softmax/accumulator stats stay f32
    # (v5e-safe); matmuls run in bf16 on the MXU.  For the causal path the mask is
    # generated in-kernel and tiles entirely above the diagonal are skipped.
    # NOTE: rows that are fully masked across every Sk tile (padding rows with an
    # explicit mask) produce a uniform average of V rather than NaN.
    if has_mask:
        q_ref, k_ref, v_ref, mask_ref, o_ref, m_sc, l_sc, acc_sc = refs
    else:
        q_ref, k_ref, v_ref, o_ref, m_sc, l_sc, acc_sc = refs
    qi = pl.program_id(2)
    ki = pl.program_id(3)
    tq = q_ref.shape[2]
    tk = k_ref.shape[2]

    @pl.when(ki == 0)
    def _():
        m_sc[...] = jnp.full_like(m_sc, -jnp.inf)
        l_sc[...] = jnp.zeros_like(l_sc)
        acc_sc[...] = jnp.zeros_like(acc_sc)

    def compute():
        q = q_ref[0, 0]                                       # (tq, Dh) bf16 (pre-scaled)
        k = k_ref[0, 0]                                       # (tk, Dh) bf16
        v = v_ref[0, 0]                                       # (tk, Dh) bf16
        s = jnp.einsum('qd,kd->qk', q, k,
                       preferred_element_type=jnp.float32)    # (tq, tk) f32
        if causal:
            q_pos = qi * tq + offset + lax.broadcasted_iota(jnp.int32, (tq, tk), 0)
            k_pos = ki * tk + lax.broadcasted_iota(jnp.int32, (tq, tk), 1)
            s = jnp.where(k_pos <= q_pos, s, -1e9)
        elif has_mask:
            # mask tile is (1, tk) or (tq, tk); 1.0 = attend, 0.0 = masked
            s = jnp.where(mask_ref[0, 0] > 0.5, s, -1e9)

        m_prev = m_sc[...]
        m_new = jnp.maximum(m_prev, jnp.max(s, axis=-1, keepdims=True))
        alpha = jnp.exp(m_prev - m_new)
        # TODO(synk): on v6e/v7x p could be computed in bf16 on the EUP; kept f32 for
        #             v5e compatibility and bit-stable numerics.
        p = jnp.exp(s - m_new)
        l_sc[...] = alpha * l_sc[...] + jnp.sum(p, axis=-1, keepdims=True)
        acc_sc[...] = alpha * acc_sc[...] + jnp.dot(p.astype(jnp.bfloat16), v,
                                                    preferred_element_type=jnp.float32)
        m_sc[...] = m_new

    if causal:
        # skip Sk tiles that lie entirely above the diagonal
        pl.when(ki * tk <= qi * tq + (tq - 1) + offset)(compute)
    else:
        compute()

    @pl.when(ki == pl.num_programs(3) - 1)
    def _():
        o_ref[0, 0] = (acc_sc[...] *
                       pl.reciprocal(l_sc[...], approx=True)).astype(o_ref.dtype)


# ----------------------------- kernel wrappers ---------------------------------

def head_proj(x, ws, bs, gamma=None, beta=None):
    """(Optionally pre-LN'd) projection of (B,S,D) to n head-major (B,H,S,Dh) bf16."""
    B, S, D = x.shape
    H, _, Dh = ws[0].shape
    n_out = len(ws)
    with_ln = gamma is not None
    ts = _seq_tile(S)

    in_specs = [pl.BlockSpec((1, ts, D), lambda b, si, h: (b, si, 0))]
    inputs = [x]
    if with_ln:
        in_specs += [pl.BlockSpec((1, D), lambda b, si, h: (0, 0)),
                     pl.BlockSpec((1, D), lambda b, si, h: (0, 0))]
        inputs += [gamma.reshape(1, D), beta.reshape(1, D)]
    for w, bias in zip(ws, bs):
        in_specs.append(pl.BlockSpec((1, D, Dh), lambda b, si, h: (h, 0, 0)))
        in_specs.append(pl.BlockSpec((1, 1, Dh), lambda b, si, h: (h, 0, 0)))
        inputs += [w, bias]

    out_spec = pl.BlockSpec((1, 1, ts, Dh), lambda b, si, h: (b, h, si, 0))
    out_shape = jax.ShapeDtypeStruct((B, H, S, Dh), jnp.bfloat16)
    if n_out == 1:
        out_specs_arg, out_shape_arg = out_spec, out_shape
    else:
        out_specs_arg = tuple([out_spec] * n_out)
        out_shape_arg = tuple([out_shape] * n_out)

    outs = pl.pallas_call(
        functools.partial(_head_proj_kernel, n_out=n_out, with_ln=with_ln),
        out_shape=out_shape_arg,
        grid=(B, S // ts, H),
        in_specs=in_specs,
        out_specs=out_specs_arg,
        scratch_shapes=[pltpu.VMEM((ts, D), jnp.bfloat16)],
        compiler_params=_cparams(("parallel", "parallel", "arbitrary")),
    )(*inputs)
    if n_out == 1:
        return (outs,)
    return tuple(outs)


def attn_out_linear(o_bhsd, w_o, bias, residual=None):
    """Head-major attention output (B,H,S,Dh) -> (B,S,D) f32, heads as K axis,
    optional fused sublayer residual."""
    B, H, S, Dh = o_bhsd.shape
    D = w_o.shape[2]
    ts = _seq_tile(S)
    tn = _pick_tile(D, _LANE_TILES)
    has_res = residual is not None

    in_specs = [
        pl.BlockSpec((1, 1, ts, Dh), lambda b, si, j, h: (b, h, si, 0)),
        pl.BlockSpec((1, Dh, tn), lambda b, si, j, h: (h, 0, j)),
        pl.BlockSpec((1, tn), lambda b, si, j, h: (0, j)),
    ]
    inputs = [o_bhsd, w_o, bias.reshape(1, D)]
    if has_res:
        in_specs.append(pl.BlockSpec((1, ts, tn), lambda b, si, j, h: (b, si, j)))
        inputs.append(residual)

    return pl.pallas_call(
        functools.partial(_attn_out_kernel, has_res=has_res),
        out_shape=jax.ShapeDtypeStruct((B, S, D), jnp.float32),
        grid=(B, S // ts, D // tn, H),
        in_specs=in_specs,
        out_specs=pl.BlockSpec((1, ts, tn), lambda b, si, j, h: (b, si, j)),
        compiler_params=_cparams(("parallel", "parallel", "parallel", "arbitrary")),
    )(*inputs)


def ln_linear(x2d, gamma, beta, w, bias, relu=False, out_dtype=jnp.float32):
    """LayerNorm(x) @ w + bias; LN computed once per row tile into VMEM scratch."""
    M, D = x2d.shape
    N = w.shape[1]
    tm, Mp = _row_plan(M, bytes_per_row=10 * D)   # dbl-buffered f32 x + bf16 scratch
    tn = _pick_tile(N, _LANE_TILES)
    xp = _pad_rows(x2d, Mp)
    out = pl.pallas_call(
        functools.partial(_ln_linear_kernel, relu=relu),
        out_shape=jax.ShapeDtypeStruct((Mp, N), out_dtype),
        grid=(Mp // tm, N // tn),
        in_specs=[
            pl.BlockSpec((tm, D), lambda i, j: (i, 0)),
            pl.BlockSpec((1, D), lambda i, j: (0, 0)),
            pl.BlockSpec((1, D), lambda i, j: (0, 0)),
            pl.BlockSpec((D, tn), lambda i, j: (0, j)),
            pl.BlockSpec((1, tn), lambda i, j: (0, j)),
        ],
        out_specs=pl.BlockSpec((tm, tn), lambda i, j: (i, j)),
        scratch_shapes=[pltpu.VMEM((tm, D), jnp.bfloat16)],
        compiler_params=_cparams(("parallel", "arbitrary")),   # j carries the LN scratch
    )(xp, gamma.reshape(1, D), beta.reshape(1, D), w, bias.reshape(1, N))
    return _unpad_rows(out, M)


def linear(x2d, w, bias, residual=None, relu=False):
    """x @ w + bias, K-tiled, accumulating into the resident f32 output block;
    optional fused residual add."""
    M, K = x2d.shape
    N = w.shape[1]
    tm, Mp = _row_plan(M, bytes_per_row=8 * max(K, N))
    tn = _pick_tile(N, _LANE_TILES)
    tk = _pick_tile(K, _LANE_TILES)
    has_res = residual is not None

    inputs = [_pad_rows(x2d, Mp), w, bias.reshape(1, N)]
    in_specs = [
        pl.BlockSpec((tm, tk), lambda i, j, k: (i, k)),
        pl.BlockSpec((tk, tn), lambda i, j, k: (k, j)),
        pl.BlockSpec((1, tn), lambda i, j, k: (0, j)),
    ]
    if has_res:
        inputs.append(_pad_rows(residual, Mp))
        in_specs.append(pl.BlockSpec((tm, tn), lambda i, j, k: (i, j)))

    out = pl.pallas_call(
        functools.partial(_linear_kernel, relu=relu, has_res=has_res),
        out_shape=jax.ShapeDtypeStruct((Mp, N), jnp.float32),
        grid=(Mp // tm, N // tn, K // tk),
        in_specs=in_specs,
        out_specs=pl.BlockSpec((tm, tn), lambda i, j, k: (i, j)),
        compiler_params=_cparams(("parallel", "parallel", "arbitrary")),
    )(*inputs)
    return _unpad_rows(out, M)


def adapter(x2d, residual2d, w_down, b_down, w_up, b_up):
    """Fused Houlsby adapter + outer residual: residual + x + up(relu(down(x)))."""
    M, D = x2d.shape
    A = w_down.shape[1]
    tm, Mp = _row_plan(M, bytes_per_row=24 * D)
    xp = _pad_rows(x2d, Mp)
    rp = _pad_rows(residual2d, Mp)
    out = pl.pallas_call(
        _adapter_kernel,
        out_shape=jax.ShapeDtypeStruct((Mp, D), jnp.float32),
        grid=(Mp // tm,),
        in_specs=[
            pl.BlockSpec((tm, D), lambda i: (i, 0)),
            pl.BlockSpec((tm, D), lambda i: (i, 0)),
            pl.BlockSpec((D, A), lambda i: (0, 0)),
            pl.BlockSpec((1, A), lambda i: (0, 0)),
            pl.BlockSpec((A, D), lambda i: (0, 0)),
            pl.BlockSpec((1, D), lambda i: (0, 0)),
        ],
        out_specs=pl.BlockSpec((tm, D), lambda i: (i, 0)),
        compiler_params=_cparams(("parallel",)),
    )(xp, rp, w_down, b_down.reshape(1, A), w_up, b_up.reshape(1, D))
    return _unpad_rows(out, M)


def layer_norm2d(x2d, gamma, beta):
    M, D = x2d.shape
    tm, Mp = _row_plan(M, bytes_per_row=16 * D)
    xp = _pad_rows(x2d, Mp)
    out = pl.pallas_call(
        _layernorm_kernel,
        out_shape=jax.ShapeDtypeStruct((Mp, D), jnp.float32),
        grid=(Mp // tm,),
        in_specs=[
            pl.BlockSpec((tm, D), lambda i: (i, 0)),
            pl.BlockSpec((1, D), lambda i: (0, 0)),
            pl.BlockSpec((1, D), lambda i: (0, 0)),
        ],
        out_specs=pl.BlockSpec((tm, D), lambda i: (i, 0)),
        compiler_params=_cparams(("parallel",)),
    )(xp, gamma.reshape(1, D), beta.reshape(1, D))
    return _unpad_rows(out, M)


def attention(q, k, v, mask=None, causal=False):
    """Flash-style attention.  q/k/v: (B,H,S,Dh) bf16 (q pre-scaled by 1/sqrt(Dh)).
    mask: (B|1, 1, {1|Sq}, Sk) float, 1.0 = attend; ignored when causal=True
    (causal mask generated in-kernel, offset by Sk - Sq for cached decode)."""
    B, H, Sq, Dh = q.shape
    Sk = k.shape[2]
    tq = _seq_tile(Sq)
    tk = _pick_tile(Sk, _LANE_TILES)
    offset = Sk - Sq
    assert offset >= 0
    has_mask = (mask is not None) and (not causal)

    in_specs = [
        pl.BlockSpec((1, 1, tq, Dh), lambda b, h, qi, ki: (b, h, qi, 0)),
        pl.BlockSpec((1, 1, tk, Dh), lambda b, h, qi, ki: (b, h, ki, 0)),
        pl.BlockSpec((1, 1, tk, Dh), lambda b, h, qi, ki: (b, h, ki, 0)),
    ]
    inputs = [q, k, v]
    if has_mask:
        mask = mask.astype(jnp.float32)
        if mask.shape[0] != B:
            mask = jnp.broadcast_to(mask, (B,) + mask.shape[1:])
        mq = mask.shape[2]
        assert mq in (1, Sq) and mask.shape[3] == Sk
        if mq == 1:
            in_specs.append(pl.BlockSpec((1, 1, 1, tk),
                                         lambda b, h, qi, ki: (b, 0, 0, ki)))
        else:
            in_specs.append(pl.BlockSpec((1, 1, tq, tk),
                                         lambda b, h, qi, ki: (b, 0, qi, ki)))
        inputs.append(mask)

    return pl.pallas_call(
        functools.partial(_flash_attn_kernel, causal=causal, offset=offset,
                          has_mask=has_mask),
        out_shape=jax.ShapeDtypeStruct((B, H, Sq, Dh), jnp.bfloat16),
        grid=(B, H, Sq // tq, Sk // tk),
        in_specs=in_specs,
        out_specs=pl.BlockSpec((1, 1, tq, Dh), lambda b, h, qi, ki: (b, h, qi, 0)),
        scratch_shapes=[
            pltpu.VMEM((tq, 1), jnp.float32),      # running max
            pltpu.VMEM((tq, 1), jnp.float32),      # running denom
            pltpu.VMEM((tq, Dh), jnp.float32),     # output accumulator
        ],
        compiler_params=_cparams(("parallel", "parallel", "parallel", "arbitrary")),
    )(*inputs)


# ----------------------------- model glue (plain JAX) ---------------------------
# TODO(synk): head-packing (2 heads per attention block) for Dh < 128 lane density
#             on v6e/v7x is not implemented; q/k/v stay (B, H, S, Dh).

def decoder_layer(x, memory, src_mask, trg_mask, p, enc_cache, self_cache,
                  target_domain, trg_mask_is_causal):
    B, S, D = x.shape
    sa = p['self_attn']
    ca = p['cross_attn']

    # --- self-attention sublayer (pre-LN fused into the head-major QKV projection)
    q, k, v = head_proj(x, [sa['w_q'], sa['w_k'], sa['w_v']],
                        [sa['b_q'], sa['b_k'], sa['b_v']],
                        p['ln_self_g'], p['ln_self_b'])
    if self_cache is not None:
        # TODO(synk): preallocated cache + in-place writeback (input_output_aliases /
        #             dynamic_update_slice) would avoid re-copying the cache each step.
        k = jnp.concatenate([self_cache[0], k], axis=2)
        v = jnp.concatenate([self_cache[1], v], axis=2)
    new_self_cache = (k, v)
    o = attention(q, k, v, mask=trg_mask, causal=trg_mask_is_causal)
    if target_domain is not None:
        sa_out = attn_out_linear(o, sa['wo'], sa['bo'])
        ap = p['adapters_self'][target_domain]
        x = adapter(sa_out.reshape(B * S, D), x.reshape(B * S, D),
                    ap['w_down'], ap['b_down'], ap['w_up'], ap['b_up']).reshape(B, S, D)
    else:
        x = attn_out_linear(o, sa['wo'], sa['bo'], residual=x)

    # --- cross-attention sublayer (pre-LN fused into the head-major Q projection)
    (qc,) = head_proj(x, [ca['w_q']], [ca['b_q']], p['ln_cross_g'], p['ln_cross_b'])
    if enc_cache is not None:
        kc, vc = enc_cache
    else:
        kc, vc = head_proj(memory, [ca['w_k'], ca['w_v']], [ca['b_k'], ca['b_v']])
    new_enc_cache = (kc, vc)
    oc = attention(qc, kc, vc, mask=src_mask, causal=False)
    x = attn_out_linear(oc, ca['wo'], ca['bo'], residual=x)

    # --- feed-forward sublayer (pre-LN fused into W1; hidden kept bf16 in HBM)
    h = ln_linear(x.reshape(B * S, D), p['ln_ffn_g'], p['ln_ffn_b'],
                  p['w1'], p['b1'], relu=True, out_dtype=jnp.bfloat16)
    if target_domain is not None:
        f = linear(h, p['w2'], p['b2'])
        ap = p['adapters_ffn'][target_domain]
        x = adapter(f, x.reshape(B * S, D),
                    ap['w_down'], ap['b_down'], ap['w_up'], ap['b_up']).reshape(B, S, D)
    else:
        x = linear(h, p['w2'], p['b2'], residual=x.reshape(B * S, D)).reshape(B, S, D)

    return x, new_enc_cache, new_self_cache


def transformer_decoder_forward(params, x, memory, src_mask, trg_mask,
                                enc_attn_cache_list=None, self_attn_cache_list=None,
                                target_domain=None, trg_mask_is_causal=False):
    num_layers = len(params['layers'])
    if self_attn_cache_list is None:
        self_attn_cache_list = [None] * num_layers
    if enc_attn_cache_list is None:
        enc_attn_cache_list = [None] * num_layers
    new_enc_attn_cache_list = []
    new_self_attn_cache_list = []
    layers_adapter_output = []
    for i, lp in enumerate(params['layers']):
        x, new_enc_cache, new_self_cache = decoder_layer(
            x, memory, src_mask, trg_mask, lp,
            enc_attn_cache_list[i], self_attn_cache_list[i],
            target_domain, trg_mask_is_causal)
        layers_adapter_output.append(x)
        new_self_attn_cache_list = new_self_attn_cache_list + [new_self_cache]
        new_enc_attn_cache_list = new_enc_attn_cache_list + [new_enc_cache]
    if target_domain is None:
        g, b = params['ln_g'], params['ln_b']
    else:
        g, b = params['domain_ln'][target_domain]
    B, S, D = x.shape
    norm_x = layer_norm2d(x.reshape(B * S, D), g, b).reshape(B, S, D)
    return norm_x, layers_adapter_output, new_enc_attn_cache_list, new_self_attn_cache_list


# ----------------------------- deterministic init -------------------------------

def init_params(seed, D, H, Dff, num_layers, adapter_dict):
    Dh = D // H
    q_scale = 1.0 / math.sqrt(Dh)   # folded into the Q projection (no in-kernel scale)
    key = jax.random.PRNGKey(seed)

    def nxt():
        nonlocal key
        key, sub = jax.random.split(key)
        return sub

    def dense(shape, scale=0.02):
        # matmul weights stored in bf16 (native MXU input dtype); accumulation is f32
        return (scale * jax.random.normal(nxt(), shape)).astype(jnp.bfloat16)

    def zeros(shape):
        return jnp.zeros(shape, jnp.float32)

    def ones(shape):
        return jnp.ones(shape, jnp.float32)

    def head_w():
        return dense((H, D, Dh))

    def head_b():
        return zeros((H, 1, Dh))

    def attn_params():
        return {'w_q': (head_w() * q_scale).astype(jnp.bfloat16),
                'b_q': head_b() * q_scale,
                'w_k': head_w(), 'b_k': head_b(),
                'w_v': head_w(), 'b_v': head_b(),
                'wo': dense((H, Dh, D)), 'bo': zeros((D,))}

    def adapter_params(A):
        return {'w_down': dense((D, A)), 'b_down': zeros((A,)),
                'w_up': dense((A, D)), 'b_up': zeros((D,))}

    layers = []
    for _ in range(num_layers):
        layers.append({
            'ln_self_g': ones((D,)), 'ln_self_b': zeros((D,)),
            'ln_cross_g': ones((D,)), 'ln_cross_b': zeros((D,)),
            'ln_ffn_g': ones((D,)), 'ln_ffn_b': zeros((D,)),
            'self_attn': attn_params(),
            'cross_attn': attn_params(),
            'w1': dense((D, Dff)), 'b1': zeros((Dff,)),
            'w2': dense((Dff, D)), 'b2': zeros((D,)),
            'adapters_self': {d: adapter_params(a) for d, a in adapter_dict.items()},
            'adapters_ffn': {d: adapter_params(a) for d, a in adapter_dict.items()},
        })

    # final LayerNorm + domain-specific LayerNorms (PyTorch default init: weight=1,
    # bias=0; init_adapter_parameter() copies these — identical values).
    return {
        'layers': layers,
        'num_heads': H,
        'ln_g': ones((D,)), 'ln_b': zeros((D,)),
        'domain_ln': {d: (ones((D,)), zeros((D,))) for d in adapter_dict},
    }


# ----------------------------- demo -------------------------------

if __name__ == "__main__":
    B, S, S_MEM, D, H, DFF = 2, 8, 12, 32, 4, 64
    NUM_LAYERS = 2
    adapter_dict = {"news": 8, "law": 8}

    params = init_params(0, D, H, DFF, NUM_LAYERS, adapter_dict)

    key = jax.random.PRNGKey(0)
    kx, km = jax.random.split(key)
    x = jax.random.normal(kx, (B, S, D), jnp.float32)
    memory = jax.random.normal(km, (B, S_MEM, D), jnp.float32)

    # masks: 1.0 = attend, 0.0 = masked
    trg_mask = jnp.broadcast_to(jnp.tril(jnp.ones((S, S), jnp.float32))[None, None],
                                (B, 1, S, S))
    src_mask = jnp.ones((B, 1, 1, S_MEM), jnp.float32)

    # domain-specific path (adapters + domain LN), in-kernel causal mask fast path
    norm_x, layer_outs, enc_caches, self_caches = transformer_decoder_forward(
        params, x, memory, src_mask, trg_mask,
        target_domain="news", trg_mask_is_causal=True)
    jax.block_until_ready(norm_x)

    # same path with the explicit DMA'd trg_mask — must agree with the causal path
    norm_x_m, _, _, _ = transformer_decoder_forward(
        params, x, memory, src_mask, trg_mask,
        target_domain="news", trg_mask_is_causal=False)
    jax.block_until_ready(norm_x_m)

    # generic path (shared final layer norm, no adapters)
    norm_x2, _, _, _ = transformer_decoder_forward(
        params, x, memory, src_mask, trg_mask, target_domain=None)
    jax.block_until_ready(norm_x2)

    assert norm_x.shape == (B, S, D)
    assert len(layer_outs) == NUM_LAYERS
    assert len(enc_caches) == NUM_LAYERS and len(self_caches) == NUM_LAYERS
    assert enc_caches[0][0].shape == (B, H, S_MEM, D // H)
    assert self_caches[0][0].shape == (B, H, S, D // H)
    assert bool(jnp.all(jnp.isfinite(norm_x))) and bool(jnp.all(jnp.isfinite(norm_x2)))
    assert bool(jnp.allclose(norm_x, norm_x_m, atol=1e-2, rtol=1e-2))

    print("KERNEL_OK")
</pallas_src>

<mosaic_0001>
module attributes {stable_mosaic.version = 11 : i64} {
  func.func @_head_proj_kernel(%arg0: i32, %arg1: i32, %arg2: i32, %arg3: memref<1x8x32xf32, #tpu.memory_space<vmem>>, %arg4: memref<1x32xf32, #tpu.memory_space<vmem>>, %arg5: memref<1x32xf32, #tpu.memory_space<vmem>>, %arg6: memref<1x32x8xbf16, #tpu.memory_space<vmem>>, %arg7: memref<1x1x8xf32, #tpu.memory_space<vmem>>, %arg8: memref<1x32x8xbf16, #tpu.memory_space<vmem>>, %arg9: memref<1x1x8xf32, #tpu.memory_space<vmem>>, %arg10: memref<1x32x8xbf16, #tpu.memory_space<vmem>>, %arg11: memref<1x1x8xf32, #tpu.memory_space<vmem>>, %arg12: memref<1x1x8x8xbf16, #tpu.memory_space<vmem>>, %arg13: memref<1x1x8x8xbf16, #tpu.memory_space<vmem>>, %arg14: memref<1x1x8x8xbf16, #tpu.memory_space<vmem>>, %arg15: memref<8x32xbf16, #tpu.memory_space<vmem>>) attributes {dimension_semantics = [#tpu.dimension_semantics<parallel>, #tpu.dimension_semantics<parallel>, #tpu.dimension_semantics<arbitrary>], iteration_bounds = array<i64: 2, 1, 4>, scalar_prefetch = 0 : i64, scratch_operands = 1 : i64, tpu.core_type = #tpu.core_type<tc>, window_params = [{transform_indices = @transform_0, window_bounds = array<i64: 1, 8, 32>}, {pipeline_mode = #tpu.pipeline_mode<synchronous>, transform_indices = @transform_1, window_bounds = array<i64: 1, 32>}, {pipeline_mode = #tpu.pipeline_mode<synchronous>, transform_indices = @transform_2, window_bounds = array<i64: 1, 32>}, {transform_indices = @transform_3, window_bounds = array<i64: 1, 32, 8>}, {transform_indices = @transform_4, window_bounds = array<i64: 1, 1, 8>}, {transform_indices = @transform_5, window_bounds = array<i64: 1, 32, 8>}, {transform_indices = @transform_6, window_bounds = array<i64: 1, 1, 8>}, {transform_indices = @transform_7, window_bounds = array<i64: 1, 32, 8>}, {transform_indices = @transform_8, window_bounds = array<i64: 1, 1, 8>}, {transform_indices = @transform_9, window_bounds = array<i64: 1, 1, 8, 8>}, {transform_indices = @transform_10, window_bounds = array<i64: 1, 1, 8, 8>}, {transform_indices = @transform_11, window_bounds = array<i64: 1, 1, 8, 8>}]} {
    %c0_i32 = arith.constant 0 : i32
    %0 = arith.cmpi eq, %arg2, %c0_i32 : i32
    %1 = arith.extui %0 : i1 to i32
    %c0_i32_0 = arith.constant 0 : i32
    %2 = arith.cmpi ne, %1, %c0_i32_0 : i32
    scf.if %2 {
      %c0_34 = arith.constant 0 : index
      %c0_35 = arith.constant 0 : index
      %c0_36 = arith.constant 0 : index
      %37 = vector.load %arg3[%c0_34, %c0_35, %c0_36] : memref<1x8x32xf32, #tpu.memory_space<vmem>>, vector<1x8x32xf32>
      %38 = vector.shape_cast %37 : vector<1x8x32xf32> to vector<8x32xf32>
      %cst_37 = arith.constant dense<0.000000e+00> : vector<8xf32>
      %39 = vector.multi_reduction <add>, %38, %cst_37 [1] : vector<8x32xf32> to vector<8xf32>
      %40 = vector.shape_cast %39 : vector<8xf32> to vector<8x1xf32>
      %cst_38 = arith.constant 3.200000e+01 : f32
      %41 = vector.broadcast %cst_38 : f32 to vector<8x1xf32>
      %42 = arith.divf %40, %41 : vector<8x1xf32>
      %43 = vector.broadcast %42 : vector<8x1xf32> to vector<8x32xf32>
      %44 = arith.subf %38, %43 : vector<8x32xf32>
      %45 = arith.mulf %44, %44 : vector<8x32xf32>
      %cst_39 = arith.constant dense<0.000000e+00> : vector<8xf32>
      %46 = vector.multi_reduction <add>, %45, %cst_39 [1] : vector<8x32xf32> to vector<8xf32>
      %47 = vector.shape_cast %46 : vector<8xf32> to vector<8x1xf32>
      %cst_40 = arith.constant 3.200000e+01 : f32
      %48 = vector.broadcast %cst_40 : f32 to vector<8x1xf32>
      %49 = arith.divf %47, %48 : vector<8x1xf32>
      %50 = vector.broadcast %42 : vector<8x1xf32> to vector<8x32xf32>
      %51 = arith.subf %38, %50 : vector<8x32xf32>
      %cst_41 = arith.constant 9.99999974E-6 : f32
      %52 = vector.broadcast %cst_41 : f32 to vector<8x1xf32>
      %53 = arith.addf %49, %52 : vector<8x1xf32>
      %54 = math.rsqrt %53 : vector<8x1xf32>
      %55 = vector.broadcast %54 : vector<8x1xf32> to vector<8x32xf32>
      %56 = arith.mulf %51, %55 : vector<8x32xf32>
      %c0_42 = arith.constant 0 : index
      %c0_43 = arith.constant 0 : index
      %57 = vector.load %arg4[%c0_42, %c0_43] : memref<1x32xf32, #tpu.memory_space<vmem>>, vector<1x32xf32>
      %58 = vector.broadcast %57 : vector<1x32xf32> to vector<8x32xf32>
      %59 = arith.mulf %56, %58 : vector<8x32xf32>
      %c0_44 = arith.constant 0 : index
      %c0_45 = arith.constant 0 : index
      %60 = vector.load %arg5[%c0_44, %c0_45] : memref<1x32xf32, #tpu.memory_space<vmem>>, vector<1x32xf32>
      %61 = vector.broadcast %60 : vector<1x32xf32> to vector<8x32xf32>
      %62 = arith.addf %59, %61 : vector<8x32xf32>
      %63 = arith.truncf %62 : vector<8x32xf32> to vector<8x32xbf16>
      %c0_46 = arith.constant 0 : index
      %c0_47 = arith.constant 0 : index
      %64 = vector.load %arg15[%c0_46, %c0_47] : memref<8x32xbf16, #tpu.memory_space<vmem>>, vector<8x32xbf16>
      tpu.vector_store %arg15[%c0_46, %c0_47], %63 {strides = array<i32>} : memref<8x32xbf16, #tpu.memory_space<vmem>>, vector<8x32xbf16>,
    } else {
    }
    %c0 = arith.constant 0 : index
    %c0_1 = arith.constant 0 : index
    %3 = vector.load %arg15[%c0, %c0_1] : memref<8x32xbf16, #tpu.memory_space<vmem>>, vector<8x32xbf16>
    %c0_2 = arith.constant 0 : index
    %c0_3 = arith.constant 0 : index
    %c0_4 = arith.constant 0 : index
    %4 = vector.load %arg6[%c0_2, %c0_3, %c0_4] : memref<1x32x8xbf16, #tpu.memory_space<vmem>>, vector<1x32x8xbf16>
    %5 = vector.shape_cast %4 : vector<1x32x8xbf16> to vector<32x8xbf16>
    %c0_5 = arith.constant 0 : index
    %c0_6 = arith.constant 0 : index
    %c0_7 = arith.constant 0 : index
    %6 = vector.load %arg7[%c0_5, %c0_6, %c0_7] : memref<1x1x8xf32, #tpu.memory_space<vmem>>, vector<1x1x8xf32>
    %7 = vector.shape_cast %6 : vector<1x1x8xf32> to vector<1x8xf32>
    %cst = arith.constant dense<0.000000e+00> : vector<8x8xf32>
    %8 = tpu.matmul %3, %5, %cst {dimension_numbers = #tpu.dot_dimension_numbers<[1], [0], [0], [1], [0, 0, 1, 1], [], []>} : vector<8x32xbf16>, vector<32x8xbf16>, vector<8x8xf32> -> vector<8x8xf32>
    %9 = vector.broadcast %7 : vector<1x8xf32> to vector<8x8xf32>
    %10 = arith.addf %8, %9 : vector<8x8xf32>
    %11 = arith.truncf %10 : vector<8x8xf32> to vector<8x8xbf16>
    %c0_8 = arith.constant 0 : index
    %c0_9 = arith.constant 0 : index
    %c0_10 = arith.constant 0 : index
    %c0_11 = arith.constant 0 : index
    %12 = vector.load %arg12[%c0_8, %c0_9, %c0_10, %c0_11] : memref<1x1x8x8xbf16, #tpu.memory_space<vmem>>, vector<1x1x8x8xbf16>
    %13 = vector.shape_cast %12 : vector<1x1x8x8xbf16> to vector<8x8xbf16>
    %14 = vector.shape_cast %11 : vector<8x8xbf16> to vector<1x1x8x8xbf16>
    tpu.vector_store %arg12[%c0_8, %c0_9, %c0_10, %c0_11], %14 {strides = array<i32>} : memref<1x1x8x8xbf16, #tpu.memory_space<vmem>>, vector<1x1x8x8xbf16>,
    %c0_12 = arith.constant 0 : index
    %c0_13 = arith.constant 0 : index
    %c0_14 = arith.constant 0 : index
    %15 = vector.load %arg8[%c0_12, %c0_13, %c0_14] : memref<1x32x8xbf16, #tpu.memory_space<vmem>>, vector<1x32x8xbf16>
    %16 = vector.shape_cast %15 : vector<1x32x8xbf16> to vector<32x8xbf16>
    %c0_15 = arith.constant 0 : index
    %c0_16 = arith.constant 0 : index
    %c0_17 = arith.constant 0 : index
    %17 = vector.load %arg9[%c0_15, %c0_16, %c0_17] : memref<1x1x8xf32, #tpu.memory_space<vmem>>, vector<1x1x8xf32>
    %18 = vector.shape_cast %17 : vector<1x1x8xf32> to vector<1x8xf32>
    %cst_18 = arith.constant dense<0.000000e+00> : vector<8x8xf32>
    %19 = tpu.matmul %3, %16, %cst_18 {dimension_numbers = #tpu.dot_dimension_numbers<[1], [0], [0], [1], [0, 0, 1, 1], [], []>} : vector<8x32xbf16>, vector<32x8xbf16>, vector<8x8xf32> -> vector<8x8xf32>
    %20 = vector.broadcast %18 : vector<1x8xf32> to vector<8x8xf32>
    %21 = arith.addf %19, %20 : vector<8x8xf32>
    %22 = arith.truncf %21 : vector<8x8xf32> to vector<8x8xbf16>
    %c0_19 = arith.constant 0 : index
    %c0_20 = arith.constant 0 : index
    %c0_21 = arith.constant 0 : index
    %c0_22 = arith.constant 0 : index
    %23 = vector.load %arg13[%c0_19, %c0_20, %c0_21, %c0_22] : memref<1x1x8x8xbf16, #tpu.memory_space<vmem>>, vector<1x1x8x8xbf16>
    %24 = vector.shape_cast %23 : vector<1x1x8x8xbf16> to vector<8x8xbf16>
    %25 = vector.shape_cast %22 : vector<8x8xbf16> to vector<1x1x8x8xbf16>
    tpu.vector_store %arg13[%c0_19, %c0_20, %c0_21, %c0_22], %25 {strides = array<i32>} : memref<1x1x8x8xbf16, #tpu.memory_space<vmem>>, vector<1x1x8x8xbf16>,
    %c0_23 = arith.constant 0 : index
    %c0_24 = arith.constant 0 : index
    %c0_25 = arith.constant 0 : index
    %26 = vector.load %arg10[%c0_23, %c0_24, %c0_25] : memref<1x32x8xbf16, #tpu.memory_space<vmem>>, vector<1x32x8xbf16>
    %27 = vector.shape_cast %26 : vector<1x32x8xbf16> to vector<32x8xbf16>
    %c0_26 = arith.constant 0 : index
    %c0_27 = arith.constant 0 : index
    %c0_28 = arith.constant 0 : index
    %28 = vector.load %arg11[%c0_26, %c0_27, %c0_28] : memref<1x1x8xf32, #tpu.memory_space<vmem>>, vector<1x1x8xf32>
    %29 = vector.shape_cast %28 : vector<1x1x8xf32> to vector<1x8xf32>
    %cst_29 = arith.constant dense<0.000000e+00> : vector<8x8xf32>
    %30 = tpu.matmul %3, %27, %cst_29 {dimension_numbers = #tpu.dot_dimension_numbers<[1], [0], [0], [1], [0, 0, 1, 1], [], []>} : vector<8x32xbf16>, vector<32x8xbf16>, vector<8x8xf32> -> vector<8x8xf32>
    %31 = vector.broadcast %29 : vector<1x8xf32> to vector<8x8xf32>
    %32 = arith.addf %30, %31 : vector<8x8xf32>
    %33 = arith.truncf %32 : vector<8x8xf32> to vector<8x8xbf16>
    %c0_30 = arith.constant 0 : index
    %c0_31 = arith.constant 0 : index
    %c0_32 = arith.constant 0 : index
    %c0_33 = arith.constant 0 : index
    %34 = vector.load %arg14[%c0_30, %c0_31, %c0_32, %c0_33] : memref<1x1x8x8xbf16, #tpu.memory_space<vmem>>, vector<1x1x8x8xbf16>
    %35 = vector.shape_cast %34 : vector<1x1x8x8xbf16> to vector<8x8xbf16>
    %36 = vector.shape_cast %33 : vector<8x8xbf16> to vector<1x1x8x8xbf16>
    tpu.vector_store %arg14[%c0_30, %c0_31, %c0_32, %c0_33], %36 {strides = array<i32>} : memref<1x1x8x8xbf16, #tpu.memory_space<vmem>>, vector<1x1x8x8xbf16>,
    return
  }
  func.func @transform_0(%arg0: i32, %arg1: i32, %arg2: i32) -> (i32, i32, i32) {
    %c0_i32 = arith.constant 0 : i32
    %c0_i32_0 = arith.constant 0 : i32
    return %arg0, %arg1, %c0_i32 : i32, i32, i32
  }
  func.func @transform_1(%arg0: i32, %arg1: i32, %arg2: i32) -> (i32, i32) {
    %c0_i32 = arith.constant 0 : i32
    %c0_i32_0 = arith.constant 0 : i32
    %c0_i32_1 = arith.constant 0 : i32
    return %c0_i32, %c0_i32_0 : i32, i32
  }
  func.func @transform_2(%arg0: i32, %arg1: i32, %arg2: i32) -> (i32, i32) {
    %c0_i32 = arith.constant 0 : i32
    %c0_i32_0 = arith.constant 0 : i32
    %c0_i32_1 = arith.constant 0 : i32
    return %c0_i32, %c0_i32_0 : i32, i32
  }
  func.func @transform_3(%arg0: i32, %arg1: i32, %arg2: i32) -> (i32, i32, i32) {
    %c0_i32 = arith.constant 0 : i32
    %c0_i32_0 = arith.constant 0 : i32
    %c0_i32_1 = arith.constant 0 : i32
    return %arg2, %c0_i32, %c0_i32_0 : i32, i32, i32
  }
  func.func @transform_4(%arg0: i32, %arg1: i32, %arg2: i32) -> (i32, i32, i32) {
    %c0_i32 = arith.constant 0 : i32
    %c0_i32_0 = arith.constant 0 : i32
    %c0_i32_1 = arith.constant 0 : i32
    return %arg2, %c0_i32, %c0_i32_0 : i32, i32, i32
  }
  func.func @transform_5(%arg0: i32, %arg1: i32, %arg2: i32) -> (i32, i32, i32) {
    %c0_i32 = arith.constant 0 : i32
    %c0_i32_0 = arith.constant 0 : i32
    %c0_i32_1 = arith.constant 0 : i32
    return %arg2, %c0_i32, %c0_i32_0 : i32, i32, i32
  }
  func.func @transform_6(%arg0: i32, %arg1: i32, %arg2: i32) -> (i32, i32, i32) {
    %c0_i32 = arith.constant 0 : i32
    %c0_i32_0 = arith.constant 0 : i32
    %c0_i32_1 = arith.constant 0 : i32
    return %arg2, %c0_i32, %c0_i32_0 : i32, i32, i32
  }
  func.func @transform_7(%arg0: i32, %arg1: i32, %arg2: i32) -> (i32, i32, i32) {
    %c0_i32 = arith.constant 0 : i32
    %c0_i32_0 = arith.constant 0 : i32
    %c0_i32_1 = arith.constant 0 : i32
    return %arg2, %c0_i32, %c0_i32_0 : i32, i32, i32
  }
  func.func @transform_8(%arg0: i32, %arg1: i32, %arg2: i32) -> (i32, i32, i32) {
    %c0_i32 = arith.constant 0 : i32
    %c0_i32_0 = arith.constant 0 : i32
    %c0_i32_1 = arith.constant 0 : i32
    return %arg2, %c0_i32, %c0_i32_0 : i32, i32, i32
  }
  func.func @transform_9(%arg0: i32, %arg1: i32, %arg2: i32) -> (i32, i32, i32, i32) {
    %c0_i32 = arith.constant 0 : i32
    %c0_i32_0 = arith.constant 0 : i32
    return %arg0, %arg2, %arg1, %c0_i32 : i32, i32, i32, i32
  }
  func.func @transform_10(%arg0: i32, %arg1: i32, %arg2: i32) -> (i32, i32, i32, i32) {
    %c0_i32 = arith.constant 0 : i32
    %c0_i32_0 = arith.constant 0 : i32
    return %arg0, %arg2, %arg1, %c0_i32 : i32, i32, i32, i32
  }
  func.func @transform_11(%arg0: i32, %arg1: i32, %arg2: i32) -> (i32, i32, i32, i32) {
    %c0_i32 = arith.constant 0 : i32
    %c0_i32_0 = arith.constant 0 : i32
    return %arg0, %arg2, %arg1, %c0_i32 : i32, i32, i32, i32
  }
}

</mosaic_0001>

<llo_original>
// kernel: tpu_custom_call.1
$region0: #{tpu_custom_call.1}
  #allocation0 [shape = 'u32[]', space=smem, size = 0x4, offset = 0x4, fixed_abs, tag = 'smem constant byte address 0x4 - core index']
  #allocation1 [shape = 'u32[144,128]{1,0:T(1,128)}', space=vmem, size = 0x12000, scoped, tag = 'internal scratch']
  #allocation2 [shape = 'bf16[8,32]{1,0:T(8,128)(2,1)}', space=vmem, size = 0x800, scoped, tag = 'scratch operand']
  %s0 = inlined_call_operand.vmem [shape: f32[2,8,32], index: 0, kind: input, shape index: {}]
  %s1 = inlined_call_operand.vmem [shape: f32[1,32], index: 1, kind: input, shape index: {}]
  %s2 = inlined_call_operand.vmem [shape: f32[1,32], index: 2, kind: input, shape index: {}]
  %s3 = inlined_call_operand.vmem [shape: bf16[4,32,8], index: 3, kind: input, shape index: {}]
  %s4 = inlined_call_operand.vmem [shape: f32[4,1,8], index: 4, kind: input, shape index: {}]
  %s5 = inlined_call_operand.vmem [shape: bf16[4,32,8], index: 5, kind: input, shape index: {}]
  %s6 = inlined_call_operand.vmem [shape: f32[4,1,8], index: 6, kind: input, shape index: {}]
  %s7 = inlined_call_operand.vmem [shape: bf16[4,32,8], index: 7, kind: input, shape index: {}]
  %s8 = inlined_call_operand.vmem [shape: f32[4,1,8], index: 8, kind: input, shape index: {}]
  %s9 = inlined_call_operand.hbm [shape: bf16[2,4,8,8], index: 9, kind: output, shape index: {0}]
  %s10 = inlined_call_operand.hbm [shape: bf16[2,4,8,8], index: 10, kind: output, shape index: {1}]
  %s11 = inlined_call_operand.hbm [shape: bf16[2,4,8,8], index: 11, kind: output, shape index: {2}]
  %12 = xla_tuple %s9, %s10, %s11
  %s13 = sld [smem:[#allocation0]]
  $region89: #{tpu_custom_call.1} parent=0
    _
  %s15 = ssub.s32 1, %s13
  %s16 = scalar_select 0, %s15, %s13
  $region1: #{tpu_custom_call.1} parent=0
    #allocation3 [shape = 'u8[4096]{0}', space=vmem, size = 0x1000, scoped, tag = 'output window, operand 0']
    #allocation4 [shape = 's32[2]{0}', space=sflag, size = 0x8, scoped, tag = 'scoped memory for tpu_custom_call.1']
    #allocation5 [shape = 'u8[4096]{0}', space=vmem, size = 0x1000, scoped, tag = 'output window, operand 1']
    #allocation6 [shape = 's32[2]{0}', space=sflag, size = 0x8, scoped, tag = 'scoped memory for tpu_custom_call.1']
    #allocation7 [shape = 'u8[4096]{0}', space=vmem, size = 0x1000, scoped, tag = 'output window, operand 2']
    %17 = vsyncpa [#allocation4], 0
    %s18 = scalar_lea.sflag [#allocation4], 1
    %19 = vsyncpa %s18, 0
    %20 = vsyncpa [#allocation6], 0
    %s21 = scalar_lea.sflag [#allocation6], 1
    %22 = vsyncpa %s21, 0
    loop: start=0, step=1, limit=10
    $region2: #{tpu_custom_call.1} parent=1 // loop_pre_header
      _
    $region3: #{tpu_custom_call.1} parent=1 // loop_header
      %s24 = sphi 0, %s28
      %p25 = scmp.ge.s32.totalorder %s24, 10
      %s31 = sphi 0, %s50
      %s32 = sphi 0, %s46
      %s33 = sphi 0, %s42
      %s34 = sphi 0, %s31
      %s35 = sphi 0, %s32
      %s36 = sphi 0, %s33
      %s37 = sphi 0, %s34
      %s38 = sphi 0, %s35
      %s39 = sphi 0, %s36
      %s55 = sphi 0, %s57
      %s58 = sphi 0, %s55
      %s59 = sphi 0, %s58
      %s75 = sphi 0, %s59
      %s79 = sphi 0, %s79
      %s81 = sphi 0, %s79
      %s82 = sphi 0, %s81
      %s96 = sphi 0, %s82
      %s100 = sphi 0, %s100
      %s102 = sphi 0, %s100
      %s103 = sphi 0, %s102
      %s117 = sphi 0, %s103
      %s123 = sphi 0, %s125
      %s126 = sphi 0, %s123
      %s127 = sphi 0, %s126
      %s143 = sphi 0, %s127
      %s149 = sphi 0, %s151
      %s152 = sphi 0, %s149
      %s153 = sphi 0, %s152
      %s169 = sphi 0, %s153
      %s175 = sphi 0, %s177
      %s178 = sphi 0, %s175
      %s179 = sphi 0, %s178
      %s195 = sphi 0, %s179
      %s201 = sphi 0, %s203
      %s204 = sphi 0, %s201
      %s205 = sphi 0, %s204
      %s221 = sphi 0, %s205
      %s227 = sphi 0, %s229
      %s230 = sphi 0, %s227
      %s231 = sphi 0, %s230
      %s247 = sphi 0, %s231
      %s253 = sphi 0, %s255
      %s256 = sphi 0, %s253
      %s257 = sphi 0, %s256
      %s273 = sphi 0, %s257
      %s283 = sphi 0, %s285
      %s286 = sphi 0, %s283
      %s287 = sphi 0, %s286
      %s303 = sphi 0, %s287
      %s313 = sphi 0, %s315
      %s316 = sphi 0, %s313
      %s317 = sphi 0, %s316
      %s333 = sphi 0, %s317
      %s343 = sphi 0, %s345
      %s346 = sphi 0, %s343
      %s347 = sphi 0, %s346
      %s363 = sphi 0, %s347
    $region4: #{tpu_custom_call.1} parent=1 // loop_header_branch
      %27 = sbr.rel (%p25) target = $region8
    $region5: #{tpu_custom_call.1} parent=1 // loop_body
      %s29 = ssub.s32 %s24, 1
      %s30 = ssub.s32 %s24, 2
      %s40 = sadd.s32 1, %s33
      %p41 = scmp.ge.s32.totalorder %s40, 4
      %s42 = scalar_select %p41, 0, %s40
      %s43 = sadd.s32 1, %s32
      %s44 = scalar_select %p41, %s43, %s32
      %p45 = scmp.ge.s32.totalorder %s44, 1
      %s46 = scalar_select %p45, 0, %s44
      %s47 = sadd.s32 1, %s31
      %s48 = scalar_select %p45, %s47, %s31
      %p49 = scmp.ge.s32.totalorder %s48, 2
      %s50 = scalar_select %p49, 0, %s48
      %s51 = ssub.s32 %s31, %s50
      %s52 = ssub.s32 %s32, %s46
      %s53 = sor.u32 %s51, %s52
      %p54 = scmp.eq.s32.totalorder %s53, 0
      %s56 = sadd.s32 %s55, 1
      %s57 = scalar_select %p54, %s55, %s56
      %p60 = pneg %p54
      %p61 = scmp.eq.s32.totalorder %s24, 7
      %p62 = por %p60, %p61
      %p63 = scmp.ne.s32.totalorder %s55, %s58
      %p64 = scmp.eq.s32.totalorder %s24, 0
      %p65 = por %p63, %p64
      %p66 = scmp.ne.s32.totalorder %s55, %s58
      %p67 = scmp.eq.s32.totalorder %s29, 7
      %p68 = por %p66, %p67
      %p69 = scmp.ne.s32.totalorder %s58, %s59
      %p70 = scmp.eq.s32.totalorder %s29, 0
      %p71 = por %p69, %p70
      %p72 = scmp.ne.s32.totalorder %s58, %s59
      %p73 = scmp.eq.s32.totalorder %s30, 7
      %p74 = por %p72, %p73
      %p76 = scmp.ne.s32.totalorder %s59, %s75
      %p77 = scmp.eq.s32.totalorder %s30, 0
      %p78 = por %p76, %p77
      %s80 = sadd.s32 %s79, 1
      %p83 = scmp.eq.s32.totalorder %s24, 7
      %p84 = scmp.ne.s32.totalorder %s79, %s81
      %p85 = scmp.eq.s32.totalorder %s24, 0
      %p86 = por %p84, %p85
      %p87 = scmp.ne.s32.totalorder %s79, %s81
      %p88 = scmp.eq.s32.totalorder %s29, 7
      %p89 = por %p87, %p88
      %p90 = scmp.ne.s32.totalorder %s81, %s82
      %p91 = scmp.eq.s32.totalorder %s29, 0
      %p92 = por %p90, %p91
      %p93 = scmp.ne.s32.totalorder %s81, %s82
      %p94 = scmp.eq.s32.totalorder %s30, 7
      %p95 = por %p93, %p94
      %p97 = scmp.ne.s32.totalorder %s82, %s96
      %p98 = scmp.eq.s32.totalorder %s30, 0
      %p99 = por %p97, %p98
      %s101 = sadd.s32 %s100, 1
      %p104 = scmp.eq.s32.totalorder %s24, 7
      %p105 = scmp.ne.s32.totalorder %s100, %s102
      %p106 = scmp.eq.s32.totalorder %s24, 0
      %p107 = por %p105, %p106
      %p108 = scmp.ne.s32.totalorder %s100, %s102
      %p109 = scmp.eq.s32.totalorder %s29, 7
      %p110 = por %p108, %p109
      %p111 = scmp.ne.s32.totalorder %s102, %s103
      %p112 = scmp.eq.s32.totalorder %s29, 0
      %p113 = por %p111, %p112
      %p114 = scmp.ne.s32.totalorder %s102, %s103
      %p115 = scmp.eq.s32.totalorder %s30, 7
      %p116 = por %p114, %p115
      %p118 = scmp.ne.s32.totalorder %s103, %s117
      %p119 = scmp.eq.s32.totalorder %s30, 0
      %p120 = por %p118, %p119
      %s121 = ssub.s32 %s33, %s42
      %p122 = scmp.eq.s32.totalorder %s121, 0
      %s124 = sadd.s32 %s123, 1
      %s125 = scalar_select %p122, %s123, %s124
      %p128 = pneg %p122
      %p129 = scmp.eq.s32.totalorder %s24, 7
      %p130 = por %p128, %p129
      %p131 = scmp.ne.s32.totalorder %s123, %s126
      %p132 = scmp.eq.s32.totalorder %s24, 0
      %p133 = por %p131, %p132
      %p134 = scmp.ne.s32.totalorder %s123, %s126
      %p135 = scmp.eq.s32.totalorder %s29, 7
      %p136 = por %p134, %p135
      %p137 = scmp.ne.s32.totalorder %s126, %s127
      %p138 = scmp.eq.s32.totalorder %s29, 0
      %p139 = por %p137, %p138
      %p140 = scmp.ne.s32.totalorder %s126, %s127
      %p141 = scmp.eq.s32.totalorder %s30, 7
      %p142 = por %p140, %p141
      %p144 = scmp.ne.s32.totalorder %s127, %s143
      %p145 = scmp.eq.s32.totalorder %s30, 0
      %p146 = por %p144, %p145
      %s147 = ssub.s32 %s33, %s42
      %p148 = scmp.eq.s32.totalorder %s147, 0
      %s150 = sadd.s32 %s149, 1
      %s151 = scalar_select %p148, %s149, %s150
      %p154 = pneg %p148
      %p155 = scmp.eq.s32.totalorder %s24, 7
      %p156 = por %p154, %p155
      %p157 = scmp.ne.s32.totalorder %s149, %s152
      %p158 = scmp.eq.s32.totalorder %s24, 0
      %p159 = por %p157, %p158
      %p160 = scmp.ne.s32.totalorder %s149, %s152
      %p161 = scmp.eq.s32.totalorder %s29, 7
      %p162 = por %p160, %p161
      %p163 = scmp.ne.s32.totalorder %s152, %s153
      %p164 = scmp.eq.s32.totalorder %s29, 0
      %p165 = por %p163, %p164
      %p166 = scmp.ne.s32.totalorder %s152, %s153
      %p167 = scmp.eq.s32.totalorder %s30, 7
      %p168 = por %p166, %p167
      %p170 = scmp.ne.s32.totalorder %s153, %s169
      %p171 = scmp.eq.s32.totalorder %s30, 0
      %p172 = por %p170, %p171
      %s173 = ssub.s32 %s33, %s42
      %p174 = scmp.eq.s32.totalorder %s173, 0
      %s176 = sadd.s32 %s175, 1
      %s177 = scalar_select %p174, %s175, %s176
      %p180 = pneg %p174
      %p181 = scmp.eq.s32.totalorder %s24, 7
      %p182 = por %p180, %p181
      %p183 = scmp.ne.s32.totalorder %s175, %s178
      %p184 = scmp.eq.s32.totalorder %s24, 0
      %p185 = por %p183, %p184
      %p186 = scmp.ne.s32.totalorder %s175, %s178
      %p187 = scmp.eq.s32.totalorder %s29, 7
      %p188 = por %p186, %p187
      %p189 = scmp.ne.s32.totalorder %s178, %s179
      %p190 = scmp.eq.s32.totalorder %s29, 0
      %p191 = por %p189, %p190
      %p192 = scmp.ne.s32.totalorder %s178, %s179
      %p193 = scmp.eq.s32.totalorder %s30, 7
      %p194 = por %p192, %p193
      %p196 = scmp.ne.s32.totalorder %s179, %s195
      %p197 = scmp.eq.s32.totalorder %s30, 0
      %p198 = por %p196, %p197
      %s199 = ssub.s32 %s33, %s42
      %p200 = scmp.eq.s32.totalorder %s199, 0
      %s202 = sadd.s32 %s201, 1
      %s203 = scalar_select %p200, %s201, %s202
      %p206 = pneg %p200
      %p207 = scmp.eq.s32.totalorder %s24, 7
      %p208 = por %p206, %p207
      %p209 = scmp.ne.s32.totalorder %s201, %s204
      %p210 = scmp.eq.s32.totalorder %s24, 0
      %p211 = por %p209, %p210
      %p212 = scmp.ne.s32.totalorder %s201, %s204
      %p213 = scmp.eq.s32.totalorder %s29, 7
      %p214 = por %p212, %p213
      %p215 = scmp.ne.s32.totalorder %s204, %s205
      %p216 = scmp.eq.s32.totalorder %s29, 0
      %p217 = por %p215, %p216
      %p218 = scmp.ne.s32.totalorder %s204, %s205
      %p219 = scmp.eq.s32.totalorder %s30, 7
      %p220 = por %p218, %p219
      %p222 = scmp.ne.s32.totalorder %s205, %s221
      %p223 = scmp.eq.s32.totalorder %s30, 0
      %p224 = por %p222, %p223
      %s225 = ssub.s32 %s33, %s42
      %p226 = scmp.eq.s32.totalorder %s225, 0
      %s228 = sadd.s32 %s227, 1
      %s229 = scalar_select %p226, %s227, %s228
      %p232 = pneg %p226
      %p233 = scmp.eq.s32.totalorder %s24, 7
      %p234 = por %p232, %p233
      %p235 = scmp.ne.s32.totalorder %s227, %s230
      %p236 = scmp.eq.s32.totalorder %s24, 0
      %p237 = por %p235, %p236
      %p238 = scmp.ne.s32.totalorder %s227, %s230
      %p239 = scmp.eq.s32.totalorder %s29, 7
      %p240 = por %p238, %p239
      %p241 = scmp.ne.s32.totalorder %s230, %s231
      %p242 = scmp.eq.s32.totalorder %s29, 0
      %p243 = por %p241, %p242
      %p244 = scmp.ne.s32.totalorder %s230, %s231
      %p245 = scmp.eq.s32.totalorder %s30, 7
      %p246 = por %p244, %p245
      %p248 = scmp.ne.s32.totalorder %s231, %s247
      %p249 = scmp.eq.s32.totalorder %s30, 0
      %p250 = por %p248, %p249
      %s251 = ssub.s32 %s33, %s42
      %p252 = scmp.eq.s32.totalorder %s251, 0
      %s254 = sadd.s32 %s253, 1
      %s255 = scalar_select %p252, %s253, %s254
      %p258 = pneg %p252
      %p259 = scmp.eq.s32.totalorder %s24, 7
      %p260 = por %p258, %p259
      %p261 = scmp.ne.s32.totalorder %s253, %s256
      %p262 = scmp.eq.s32.totalorder %s24, 0
      %p263 = por %p261, %p262
      %p264 = scmp.ne.s32.totalorder %s253, %s256
      %p265 = scmp.eq.s32.totalorder %s29, 7
      %p266 = por %p264, %p265
      %p267 = scmp.ne.s32.totalorder %s256, %s257
      %p268 = scmp.eq.s32.totalorder %s29, 0
      %p269 = por %p267, %p268
      %p270 = scmp.ne.s32.totalorder %s256, %s257
      %p271 = scmp.eq.s32.totalorder %s30, 7
      %p272 = por %p270, %p271
      %p274 = scmp.ne.s32.totalorder %s257, %s273
      %p275 = scmp.eq.s32.totalorder %s30, 0
      %p276 = por %p274, %p275
      %s277 = ssub.s32 %s31, %s50
      %s278 = ssub.s32 %s33, %s42
      %s279 = sor.u32 %s277, %s278
      %s280 = ssub.s32 %s32, %s46
      %s281 = sor.u32 %s279, %s280
      %p282 = scmp.eq.s32.totalorder %s281, 0
      %s284 = sadd.s32 %s283, 1
      %s285 = scalar_select %p282, %s283, %s284
      %p288 = pneg %p282
      %p289 = scmp.eq.s32.totalorder %s24, 7
      %p290 = por %p288, %p289
      %p291 = scmp.ne.s32.totalorder %s283, %s286
      %p292 = scmp.eq.s32.totalorder %s24, 0
      %p293 = por %p291, %p292
      %p294 = scmp.ne.s32.totalorder %s283, %s286
      %p295 = scmp.eq.s32.totalorder %s29, 7
      %p296 = por %p294, %p295
      %p297 = scmp.ne.s32.totalorder %s286, %s287
      %p298 = scmp.eq.s32.totalorder %s29, 0
      %p299 = por %p297, %p298
      %p300 = scmp.ne.s32.totalorder %s286, %s287
      %p301 = scmp.eq.s32.totalorder %s30, 7
      %p302 = por %p300, %p301
      %p304 = scmp.ne.s32.totalorder %s287, %s303
      %p305 = scmp.eq.s32.totalorder %s30, 0
      %p306 = por %p304, %p305
      %s307 = ssub.s32 %s31, %s50
      %s308 = ssub.s32 %s33, %s42
      %s309 = sor.u32 %s307, %s308
      %s310 = ssub.s32 %s32, %s46
      %s311 = sor.u32 %s309, %s310
      %p312 = scmp.eq.s32.totalorder %s311, 0
      %s314 = sadd.s32 %s313, 1
      %s315 = scalar_select %p312, %s313, %s314
      %p318 = pneg %p312
      %p319 = scmp.eq.s32.totalorder %s24, 7
      %p320 = por %p318, %p319
      %p321 = scmp.ne.s32.totalorder %s313, %s316
      %p322 = scmp.eq.s32.totalorder %s24, 0
      %p323 = por %p321, %p322
      %p324 = scmp.ne.s32.totalorder %s313, %s316
      %p325 = scmp.eq.s32.totalorder %s29, 7
      %p326 = por %p324, %p325
      %p327 = scmp.ne.s32.totalorder %s316, %s317
      %p328 = scmp.eq.s32.totalorder %s29, 0
      %p329 = por %p327, %p328
      %p330 = scmp.ne.s32.totalorder %s316, %s317
      %p331 = scmp.eq.s32.totalorder %s30, 7
      %p332 = por %p330, %p331
      %p334 = scmp.ne.s32.totalorder %s317, %s333
      %p335 = scmp.eq.s32.totalorder %s30, 0
      %p336 = por %p334, %p335
      %s337 = ssub.s32 %s31, %s50
      %s338 = ssub.s32 %s33, %s42
      %s339 = sor.u32 %s337, %s338
      %s340 = ssub.s32 %s32, %s46
      %s341 = sor.u32 %s339, %s340
      %p342 = scmp.eq.s32.totalorder %s341, 0
      %s344 = sadd.s32 %s343, 1
      %s345 = scalar_select %p342, %s343, %s344
      %p348 = pneg %p342
      %p349 = scmp.eq.s32.totalorder %s24, 7
      %p350 = por %p348, %p349
      %p351 = scmp.ne.s32.totalorder %s343, %s346
      %p352 = scmp.eq.s32.totalorder %s24, 0
      %p353 = por %p351, %p352
      %p354 = scmp.ne.s32.totalorder %s343, %s346
      %p355 = scmp.eq.s32.totalorder %s29, 7
      %p356 = por %p354, %p355
      %p357 = scmp.ne.s32.totalorder %s346, %s347
      %p358 = scmp.eq.s32.totalorder %s29, 0
      %p359 = por %p357, %p358
      %p360 = scmp.ne.s32.totalorder %s346, %s347
      %p361 = scmp.eq.s32.totalorder %s30, 7
      %p362 = por %p360, %p361
      %p364 = scmp.ne.s32.totalorder %s347, %s363
      %p365 = scmp.eq.s32.totalorder %s30, 0
      %p366 = por %p364, %p365
      %p367 = scmp.le.s32.totalorder 1, %s24
      %p368 = scmp.lt.s32.totalorder %s24, 9
      %p369 = pnand %p367, %p368
      %p370 = pneg %p369
      // Predicated region
      $region9: #{tpu_custom_call.1} parent=5 // pred_check
        _
      $region10: #{tpu_custom_call.1} parent=5 // pred_check_branch
        %372 = sbr.rel (%p369) target = $region12
      $region11: #{tpu_custom_call.1} parent=5 // pred_region
        %s373 = ssub.s32 %s24, 1
        // Predicated region
        $region13: #{tpu_custom_call.1} parent=11 // pred_check
          %p374 = pneg %p92
        $region14: #{tpu_custom_call.1} parent=11 // pred_check_branch
          %376 = sbr.rel (%p374) target = $region16
        $region15: #{tpu_custom_call.1} parent=11 // pred_region
          _
        $region16: #{tpu_custom_call.1} parent=11 // pred_fallthru
          _
        // Predicated region
        $region17: #{tpu_custom_call.1} parent=11 // pred_check
          %p377 = pneg %p113
        $region18: #{tpu_custom_call.1} parent=11 // pred_check_branch
          %379 = sbr.rel (%p377) target = $region20
        $region19: #{tpu_custom_call.1} parent=11 // pred_region
          _
        $region20: #{tpu_custom_call.1} parent=11 // pred_fallthru
          _
      $region12: #{tpu_custom_call.1} parent=5 // pred_fallthru
        _
      %p380 = scmp.lt.s32.totalorder %s24, 8
      // Predicated region
      $region21: #{tpu_custom_call.1} parent=5 // pred_check
        %p381 = pneg %p380
      $region22: #{tpu_custom_call.1} parent=5 // pred_check_branch
        %383 = sbr.rel (%p381) target = $region24
      $region23: #{tpu_custom_call.1} parent=5 // pred_region
        // Predicated region
        $region25: #{tpu_custom_call.1} parent=23 // pred_check
          %p384 = pneg %p65
        $region26: #{tpu_custom_call.1} parent=23 // pred_check_branch
          %386 = sbr.rel (%p384) target = $region28
        $region27: #{tpu_custom_call.1} parent=23 // pred_region
          %p387 = scmp.lt.s32.totalorder %s31, 1
          %s388 = scalar_select %p387, %s31, 1
          %p389 = scmp.lt.s32.totalorder %s32, 0
          %s390 = scalar_select %p389, %s32, 0
          %s391 = sadd.s32 %s390, %s388
          %s392 = smul.addr %s391, 8
          %s393 = scalar_lea.vmem %s0, %s392
        $region28: #{tpu_custom_call.1} parent=23 // pred_fallthru
          _
        // Predicated region
        $region29: #{tpu_custom_call.1} parent=23 // pred_check
          %p394 = pneg %p133
        $region30: #{tpu_custom_call.1} parent=23 // pred_check_branch
          %396 = sbr.rel (%p394) target = $region32
        $region31: #{tpu_custom_call.1} parent=23 // pred_region
          %p397 = scmp.lt.s32.totalorder %s33, 3
          %s398 = scalar_select %p397, %s33, 3
          %s399 = smul.addr %s398, 4
          %s400 = smul.addr %s399, 4
          %s401 = scalar_lea.vmem %s3, %s400
        $region32: #{tpu_custom_call.1} parent=23 // pred_fallthru
          _
        // Predicated region
        $region33: #{tpu_custom_call.1} parent=23 // pred_check
          %p402 = pneg %p159
        $region34: #{tpu_custom_call.1} parent=23 // pred_check_branch
          %404 = sbr.rel (%p402) target = $region36
        $region35: #{tpu_custom_call.1} parent=23 // pred_region
          %p405 = scmp.lt.s32.totalorder %s33, 3
          %s406 = scalar_select %p405, %s33, 3
          %s407 = scalar_lea.vmem %s4, %s406
        $region36: #{tpu_custom_call.1} parent=23 // pred_fallthru
          _
        // Predicated region
        $region37: #{tpu_custom_call.1} parent=23 // pred_check
          %p408 = pneg %p185
        $region38: #{tpu_custom_call.1} parent=23 // pred_check_branch
          %410 = sbr.rel (%p408) target = $region40
        $region39: #{tpu_custom_call.1} parent=23 // pred_region
          %p411 = scmp.lt.s32.totalorder %s33, 3
          %s412 = scalar_select %p411, %s33, 3
          %s413 = smul.addr %s412, 4
          %s414 = smul.addr %s413, 4
          %s415 = scalar_lea.vmem %s5, %s414
        $region40: #{tpu_custom_call.1} parent=23 // pred_fallthru
          _
        // Predicated region
        $region41: #{tpu_custom_call.1} parent=23 // pred_check
          %p416 = pneg %p211
        $region42: #{tpu_custom_call.1} parent=23 // pred_check_branch
          %418 = sbr.rel (%p416) target = $region44
        $region43: #{tpu_custom_call.1} parent=23 // pred_region
          %p419 = scmp.lt.s32.totalorder %s33, 3
          %s420 = scalar_select %p419, %s33, 3
          %s421 = scalar_lea.vmem %s6, %s420
        $region44: #{tpu_custom_call.1} parent=23 // pred_fallthru
          _
        // Predicated region
        $region45: #{tpu_custom_call.1} parent=23 // pred_check
          %p422 = pneg %p237
        $region46: #{tpu_custom_call.1} parent=23 // pred_check_branch
          %424 = sbr.rel (%p422) target = $region48
        $region47: #{tpu_custom_call.1} parent=23 // pred_region
          %p425 = scmp.lt.s32.totalorder %s33, 3
          %s426 = scalar_select %p425, %s33, 3
          %s427 = smul.addr %s426, 4
          %s428 = smul.addr %s427, 4
          %s429 = scalar_lea.vmem %s7, %s428
        $region48: #{tpu_custom_call.1} parent=23 // pred_fallthru
          _
        // Predicated region
        $region49: #{tpu_custom_call.1} parent=23 // pred_check
          %p430 = pneg %p263
        $region50: #{tpu_custom_call.1} parent=23 // pred_check_branch
          %432 = sbr.rel (%p430) target = $region52
        $region51: #{tpu_custom_call.1} parent=23 // pred_region
          %p433 = scmp.lt.s32.totalorder %s33, 3
          %s434 = scalar_select %p433, %s33, 3
          %s435 = scalar_lea.vmem %s8, %s434
        $region52: #{tpu_custom_call.1} parent=23 // pred_fallthru
          _
      $region24: #{tpu_custom_call.1} parent=5 // pred_fallthru
        _
      %p436 = scmp.le.s32.totalorder 1, %s24
      %p437 = scmp.lt.s32.totalorder %s24, 9
      %p438 = pnand %p436, %p437
      %p439 = pneg %p438
      // Predicated region
      $region53: #{tpu_custom_call.1} parent=5 // pred_check
        _
      $region54: #{tpu_custom_call.1} parent=5 // pred_check_branch
        %441 = sbr.rel (%p438) target = $region56
      $region55: #{tpu_custom_call.1} parent=5 // pred_region
        %s442 = ssub.s32 %s24, 1
        %p443 = scmp.lt.s32.totalorder %s34, 1
        %s444 = scalar_select %p443, %s34, 1
        %p445 = scmp.lt.s32.totalorder %s35, 0
        %s446 = scalar_select %p445, %s35, 0
        %s447 = sadd.s32 %s446, %s444
        %s448 = smul.addr %s447, 8
        %s449 = scalar_lea.vmem %s0, %s448
        %p450 = pneg %p71
        %p451 = pneg %p68
        %p452 = pneg %p92
        %p453 = pneg %p89
        %p454 = pneg %p113
        %p455 = pneg %p110
        %p456 = scmp.lt.s32.totalorder %s36, 3
        %s457 = scalar_select %p456, %s36, 3
        %s458 = smul.addr %s457, 4
        %s459 = smul.addr %s458, 4
        %s460 = scalar_lea.vmem %s3, %s459
        %p461 = pneg %p139
        %p462 = pneg %p136
        %p463 = scmp.lt.s32.totalorder %s36, 3
        %s464 = scalar_select %p463, %s36, 3
        %s465 = scalar_lea.vmem %s4, %s464
        %p466 = pneg %p165
        %p467 = pneg %p162
        %p468 = scmp.lt.s32.totalorder %s36, 3
        %s469 = scalar_select %p468, %s36, 3
        %s470 = smul.addr %s469, 4
        %s471 = smul.addr %s470, 4
        %s472 = scalar_lea.vmem %s5, %s471
        %p473 = pneg %p191
        %p474 = pneg %p188
        %p475 = scmp.lt.s32.totalorder %s36, 3
        %s476 = scalar_select %p475, %s36, 3
        %s477 = scalar_lea.vmem %s6, %s476
        %p478 = pneg %p217
        %p479 = pneg %p214
        %p480 = scmp.lt.s32.totalorder %s36, 3
        %s481 = scalar_select %p480, %s36, 3
        %s482 = smul.addr %s481, 4
        %s483 = smul.addr %s482, 4
        %s484 = scalar_lea.vmem %s7, %s483
        %p485 = pneg %p243
        %p486 = pneg %p240
        %p487 = scmp.lt.s32.totalorder %s36, 3
        %s488 = scalar_select %p487, %s36, 3
        %s489 = scalar_lea.vmem %s8, %s488
        %p490 = pneg %p269
        %p491 = pneg %p266
        %p492 = pneg %p299
        %p493 = pneg %p296
        %s494 = sand.u32 %s286, 1
        %s495 = scalar_lea.sflag [#allocation4], %s494
        %s496 = sand.u32 %s286, 1
        %s497 = smul.addr %s496, 4
        %s498 = scalar_lea.vmem [#allocation3], %s497
        %p499 = pneg %p329
        %p500 = pneg %p326
        %s501 = sand.u32 %s29, 1
        %s502 = scalar_lea.sflag [#allocation6], %s501
        %s503 = sand.u32 %s316, 1
        %s504 = smul.addr %s503, 4
        %s505 = scalar_lea.vmem [#allocation5], %s504
        %p506 = pneg %p359
        %p507 = pneg %p356
        %s508 = sand.u32 %s29, 1
        %s509 = scalar_lea.sflag [#allocation6], %s508
        %s510 = sand.u32 %s346, 1
        %s511 = smul.addr %s510, 4
        %s512 = scalar_lea.vmem [#allocation7], %s511
        %p513 = scmp.lt.s32.totalorder %s34, 1
        %s514 = scalar_select %p513, %s34, 1
        %p515 = scmp.lt.s32.totalorder %s35, 0
        %s516 = scalar_select %p515, %s35, 0
        %s517 = sadd.s32 %s516, %s514
        %s518 = smul.addr %s517, 8
        %s519 = scalar_lea.vmem %s0, %s518
        %p520 = scmp.lt.s32.totalorder %s36, 3
        %s521 = scalar_select %p520, %s36, 3
        %s522 = smul.addr %s521, 4
        %s523 = smul.addr %s522, 4
        %s524 = scalar_lea.vmem %s3, %s523
        %p525 = scmp.lt.s32.totalorder %s36, 3
        %s526 = scalar_select %p525, %s36, 3
        %s527 = scalar_lea.vmem %s4, %s526
        %p528 = scmp.lt.s32.totalorder %s36, 3
        %s529 = scalar_select %p528, %s36, 3
        %s530 = smul.addr %s529, 4
        %s531 = smul.addr %s530, 4
        %s532 = scalar_lea.vmem %s5, %s531
        %p533 = scmp.lt.s32.totalorder %s36, 3
        %s534 = scalar_select %p533, %s36, 3
        %s535 = scalar_lea.vmem %s6, %s534
        %p536 = scmp.lt.s32.totalorder %s36, 3
        %s537 = scalar_select %p536, %s36, 3
        %s538 = smul.addr %s537, 4
        %s539 = smul.addr %s538, 4
        %s540 = scalar_lea.vmem %s7, %s539
        %p541 = scmp.lt.s32.totalorder %s36, 3
        %s542 = scalar_select %p541, %s36, 3
        %s543 = scalar_lea.vmem %s8, %s542
        %p545 = scmp.eq.s32.totalorder %s36, 0
        // Predicated region
        $region57: #{tpu_custom_call.1} parent=55 // pred_check
          %p546 = pneg %p545
        $region58: #{tpu_custom_call.1} parent=55 // pred_check_branch
          %548 = sbr.rel (%p546) target = $region60
        $region59: #{tpu_custom_call.1} parent=55 // pred_region
          %v549 = vld [vmem:[%s519] sm:$0xff]
          %vm550 = vcmask 261120
          %v551 = vsel %vm550, %v549, 0.0
          %552 = vadd.xlane.f32.xlu0 %v551
          %v553 = vpop.xlane.xlu0 %552
          %v554 = vrcp.pop 32.0
          %v555 = vmul.f32 %v553, %v554
          %v556 = vsub.f32 %v549, %v555
          %v557 = vmul.f32 %v556, %v556
          %v558 = vsel %vm550, %v557, 0.0
          %559 = vadd.xlane.f32.xlu0 %v558
          %v560 = vpop.xlane.xlu0 %559
          %v561 = vmul.f32 %v560, %v554
          %v562 = vadd.f32 %v561, 1e-05
          %v563 = vrsqrt.pop %v562
          %v564 = vmul.f32 %v556, %v563
          %v565 = vld [vmem:[%s1] sm:$0x1]
          %v567 = vlaneseq
          %v568 = vshrl.u32 %v567, 7
          %v569 = vsub.s32 0, %v568
          %v570 = vrot.slane %v565, %v569
          %v572 = vmul.f32 %v564, %v570
          %v573 = vld [vmem:[%s2] sm:$0x1]
          %v575 = vlaneseq
          %v576 = vshrl.u32 %v575, 7
          %v577 = vsub.s32 0, %v576
          %v578 = vrot.slane %v573, %v577
          %v580 = vadd.f32 %v572, %v578
          %v581 = vpack.c.bf16 %v580, %v580
          %vm582 = vcmask 257024
          %583 = vst.msk [vmem:[#allocation2] sm:$0xf] %vm582, %v581
        $region60: #{tpu_custom_call.1} parent=55 // pred_fallthru
          _
        %v584 = vld [vmem:[#allocation2] sm:$0xf]
        %v585 = vld [vmem:[%s524] sm:$0xf]
        %v586 = vld [vmem:[%s524 + $0x4] sm:$0xf]
        %v587 = vld [vmem:[%s524 + $0x8] sm:$0xf]
        %v588 = vld [vmem:[%s524 + $0xc] sm:$0xf]
        %v589 = vld [vmem:[%s527] sm:$0x1]
        %v591 = vlaneseq
        %v592 = vshrl.u32 %v591, 7
        %v593 = vsub.s32 0, %v592
        %v594 = vrot.slane %v589, %v593
        %v600 = vunpack.c.l.b16 %v585
        %v601 = vunpack.c.l.b16 %v586
        %v602 = vunpack.c.l.b16 %v587
        %v603 = vunpack.c.l.b16 %v588
        %v604 = vpack.c.b16 %v601, %v600
        %v605 = vpack.c.b16 %v603, %v602
        %vm608 = vcmask 261120
        %v610 = vsel %vm608, %v584, 0
        %612 = vmatprep.subr.bf16.mxu0 0
        %613 = vmatpush1.bf16.msra.mxu0 %v604
        %614 = vmatprep.subr.bf16.mxu0 0
        %615 = vmatpush1.bf16.msra.mxu0 %v605
        %616 = vmatprep.subr.bf16.mxu0 0
        %617 = vmatpush1.bf16.msra.mxu0 0
        %618 = vmatprep.subr.bf16.mxu0 0
        %619 = vmatpush1.bf16.msra.mxu0 0
        %620 = vmatprep.subr.bf16.mxu0 0
        %621 = vmatpush1.bf16.msra.mxu0 0
        %622 = vmatprep.subr.bf16.mxu0 0
        %623 = vmatpush1.bf16.msra.mxu0 0
        %624 = vmatprep.subr.bf16.mxu0 0
        %625 = vmatpush1.bf16.msra.mxu0 0
        %626 = vmatprep.subr.bf16.mxu0 0
        %627 = vmatpush1.bf16.msra.mxu0 0
        %628 = vmatprep.subr.bf16.mxu0 0
        %629 = vmatpush1.bf16.msra.mxu0 0
        %630 = vmatprep.subr.bf16.mxu0 0
        %631 = vmatpush1.bf16.msra.mxu0 0
        %632 = vmatprep.subr.bf16.mxu0 0
        %633 = vmatpush1.bf16.msra.mxu0 0
        %634 = vmatprep.subr.bf16.mxu0 0
        %635 = vmatpush1.bf16.msra.mxu0 0
        %636 = vmatprep.subr.bf16.mxu0 0
        %637 = vmatpush1.bf16.msra.mxu0 0
        %638 = vmatprep.subr.bf16.mxu0 0
        %639 = vmatpush1.bf16.msra.mxu0 0
        %640 = vmatprep.subr.bf16.mxu0 0
        %641 = vmatpush1.bf16.msra.mxu0 0
        %642 = vmatprep.subr.bf16.mxu0 0
        %643 = vmatpush1.bf16.msra.mxu0 0
        %644 = vmatprep.mubr.bf16.mxu0 0
        %645 = vmatmul.mubr.bf16.gmra.mrb[0].mxu0 %v610
        %v646 = vpop.f32.mrb[0].mxu0
        %v647 = vadd.f32 %v594, %v646
        %v648 = vpop.f32.mrb[0].mxu0
        %v649 = vpop.f32.mrb[0].mxu0
        %v650 = vpop.f32.mrb[0].mxu0
        %651 = vdwg.mxu0
        %v652 = vpack.c.bf16 %v647, %v647
        %vm653 = vcmask 60416
        %654 = vst.msk [vmem:[%s498] sm:$0xf] %vm653, %v652
        %v655 = vld [vmem:[%s532] sm:$0xf]
        %v656 = vld [vmem:[%s532 + $0x4] sm:$0xf]
        %v657 = vld [vmem:[%s532 + $0x8] sm:$0xf]
        %v658 = vld [vmem:[%s532 + $0xc] sm:$0xf]
        %v659 = vld [vmem:[%s535] sm:$0x1]
        %v661 = vlaneseq
        %v662 = vshrl.u32 %v661, 7
        %v663 = vsub.s32 0, %v662
        %v664 = vrot.slane %v659, %v663
        %v670 = vunpack.c.l.b16 %v655
        %v671 = vunpack.c.l.b16 %v656
        %v672 = vunpack.c.l.b16 %v657
        %v673 = vunpack.c.l.b16 %v658
        %v674 = vpack.c.b16 %v671, %v670
        %v675 = vpack.c.b16 %v673, %v672
        %678 = vmatprep.subr.bf16.mxu0 0
        %679 = vmatpush1.bf16.msra.mxu0 %v674
        %680 = vmatprep.subr.bf16.mxu0 0
        %681 = vmatpush1.bf16.msra.mxu0 %v675
        %682 = vmatprep.subr.bf16.mxu0 0
        %683 = vmatpush1.bf16.msra.mxu0 0
        %684 = vmatprep.subr.bf16.mxu0 0
        %685 = vmatpush1.bf16.msra.mxu0 0
        %686 = vmatprep.subr.bf16.mxu0 0
        %687 = vmatpush1.bf16.msra.mxu0 0
        %688 = vmatprep.subr.bf16.mxu0 0
        %689 = vmatpush1.bf16.msra.mxu0 0
        %690 = vmatprep.subr.bf16.mxu0 0
        %691 = vmatpush1.bf16.msra.mxu0 0
        %692 = vmatprep.subr.bf16.mxu0 0
        %693 = vmatpush1.bf16.msra.mxu0 0
        %694 = vmatprep.subr.bf16.mxu0 0
        %695 = vmatpush1.bf16.msra.mxu0 0
        %696 = vmatprep.subr.bf16.mxu0 0
        %697 = vmatpush1.bf16.msra.mxu0 0
        %698 = vmatprep.subr.bf16.mxu0 0
        %699 = vmatpush1.bf16.msra.mxu0 0
        %700 = vmatprep.subr.bf16.mxu0 0
        %701 = vmatpush1.bf16.msra.mxu0 0
        %702 = vmatprep.subr.bf16.mxu0 0
        %703 = vmatpush1.bf16.msra.mxu0 0
        %704 = vmatprep.subr.bf16.mxu0 0
        %705 = vmatpush1.bf16.msra.mxu0 0
        %706 = vmatprep.subr.bf16.mxu0 0
        %707 = vmatpush1.bf16.msra.mxu0 0
        %708 = vmatprep.subr.bf16.mxu0 0
        %709 = vmatpush1.bf16.msra.mxu0 0
        %710 = vmatprep.mubr.bf16.mxu0 0
        %711 = vmatmul.mubr.bf16.gmra.mrb[0].mxu0 %v610
        %v712 = vpop.f32.mrb[0].mxu0
        %v713 = vadd.f32 %v664, %v712
        %v714 = vpop.f32.mrb[0].mxu0
        %v715 = vpop.f32.mrb[0].mxu0
        %v716 = vpop.f32.mrb[0].mxu0
        %717 = vdwg.mxu0
        %v718 = vpack.c.bf16 %v713, %v713
        %719 = vst.msk [vmem:[%s505] sm:$0xf] %vm653, %v718
        %v720 = vld [vmem:[%s540] sm:$0xf]
        %v721 = vld [vmem:[%s540 + $0x4] sm:$0xf]
        %v722 = vld [vmem:[%s540 + $0x8] sm:$0xf]
        %v723 = vld [vmem:[%s540 + $0xc] sm:$0xf]
        %v724 = vld [vmem:[%s543] sm:$0x1]
        %v726 = vlaneseq
        %v727 = vshrl.u32 %v726, 7
        %v728 = vsub.s32 0, %v727
        %v729 = vrot.slane %v724, %v728
        %v735 = vunpack.c.l.b16 %v720
        %v736 = vunpack.c.l.b16 %v721
        %v737 = vunpack.c.l.b16 %v722
        %v738 = vunpack.c.l.b16 %v723
        %v739 = vpack.c.b16 %v736, %v735
        %v740 = vpack.c.b16 %v738, %v737
        %743 = vmatprep.subr.bf16.mxu0 0
        %744 = vmatpush1.bf16.msra.mxu0 %v739
        %745 = vmatprep.subr.bf16.mxu0 0
        %746 = vmatpush1.bf16.msra.mxu0 %v740
        %747 = vmatprep.subr.bf16.mxu0 0
        %748 = vmatpush1.bf16.msra.mxu0 0
        %749 = vmatprep.subr.bf16.mxu0 0
        %750 = vmatpush1.bf16.msra.mxu0 0
        %751 = vmatprep.subr.bf16.mxu0 0
        %752 = vmatpush1.bf16.msra.mxu0 0
        %753 = vmatprep.subr.bf16.mxu0 0
        %754 = vmatpush1.bf16.msra.mxu0 0
        %755 = vmatprep.subr.bf16.mxu0 0
        %756 = vmatpush1.bf16.msra.mxu0 0
        %757 = vmatprep.subr.bf16.mxu0 0
        %758 = vmatpush1.bf16.msra.mxu0 0
        %759 = vmatprep.subr.bf16.mxu0 0
        %760 = vmatpush1.bf16.msra.mxu0 0
        %761 = vmatprep.subr.bf16.mxu0 0
        %762 = vmatpush1.bf16.msra.mxu0 0
        %763 = vmatprep.subr.bf16.mxu0 0
        %764 = vmatpush1.bf16.msra.mxu0 0
        %765 = vmatprep.subr.bf16.mxu0 0
        %766 = vmatpush1.bf16.msra.mxu0 0
        %767 = vmatprep.subr.bf16.mxu0 0
        %768 = vmatpush1.bf16.msra.mxu0 0
        %769 = vmatprep.subr.bf16.mxu0 0
        %770 = vmatpush1.bf16.msra.mxu0 0
        %771 = vmatprep.subr.bf16.mxu0 0
        %772 = vmatpush1.bf16.msra.mxu0 0
        %773 = vmatprep.subr.bf16.mxu0 0
        %774 = vmatpush1.bf16.msra.mxu0 0
        %775 = vmatprep.mubr.bf16.mxu0 0
        %776 = vmatmul.mubr.bf16.gmra.mrb[0].mxu0 %v610
        %v777 = vpop.f32.mrb[0].mxu0
        %v778 = vadd.f32 %v729, %v777
        %v779 = vpop.f32.mrb[0].mxu0
        %v780 = vpop.f32.mrb[0].mxu0
        %v781 = vpop.f32.mrb[0].mxu0
        %782 = vdwg.mxu0
        %v783 = vpack.c.bf16 %v778, %v778
        %784 = vst.msk [vmem:[%s512] sm:$0xf] %vm653, %v783
        %s785 = sand.u32 %s286, 1
        %s786 = scalar_lea.sflag [#allocation4], %s785
        %s787 = sand.u32 %s286, 1
        %s788 = smul.addr %s787, 4
        %s789 = scalar_lea.vmem [#allocation3], %s788
        %s790 = sand.u32 %s29, 1
        %s791 = scalar_lea.sflag [#allocation6], %s790
        %s792 = sand.u32 %s316, 1
        %s793 = smul.addr %s792, 4
        %s794 = scalar_lea.vmem [#allocation5], %s793
        %s795 = sand.u32 %s29, 1
        %s796 = scalar_lea.sflag [#allocation6], %s795
        %s797 = sand.u32 %s346, 1
        %s798 = smul.addr %s797, 4
        %s799 = scalar_lea.vmem [#allocation7], %s798
        // Predicated region
        $region61: #{tpu_custom_call.1} parent=55 // pred_check
          %p800 = pneg %p296
        $region62: #{tpu_custom_call.1} parent=55 // pred_check_branch
          %802 = sbr.rel (%p800) target = $region64
        $region63: #{tpu_custom_call.1} parent=55 // pred_region
          %s804 = ssub.s32 64, 64
          %805 = vsyncadd %s786, %s804
          %s806 = sadd.s32 %s35, %s36
          %s807 = smul.addr %s34, 4
          %s808 = sadd.s32 %s806, %s807
          %s809 = smul.addr %s808, 64
          %s810 = scalar_lea.hbm %s9, %s809
          %s812 = sshll.u32 %s789, 4
          %s813 = int_to_ptr.vmem [resolvable:$true] %s812
          %815 = dma.vmem_to_hbm [thread:$0]  %s813, 64, %s810, %s786
        $region64: #{tpu_custom_call.1} parent=55 // pred_fallthru
          _
        // Predicated region
        $region65: #{tpu_custom_call.1} parent=55 // pred_check
          %p816 = pneg %p326
        $region66: #{tpu_custom_call.1} parent=55 // pred_check_branch
          %818 = sbr.rel (%p816) target = $region68
        $region67: #{tpu_custom_call.1} parent=55 // pred_region
          %s820 = ssub.s32 64, 64
          %821 = vsyncadd %s791, %s820
          %s822 = sadd.s32 %s35, %s36
          %s823 = smul.addr %s34, 4
          %s824 = sadd.s32 %s822, %s823
          %s825 = smul.addr %s824, 64
          %s826 = scalar_lea.hbm %s10, %s825
          %s828 = sshll.u32 %s794, 4
          %s829 = int_to_ptr.vmem [resolvable:$true] %s828
          %831 = dma.vmem_to_hbm [thread:$0]  %s829, 64, %s826, %s791
        $region68: #{tpu_custom_call.1} parent=55 // pred_fallthru
          _
        // Predicated region
        $region69: #{tpu_custom_call.1} parent=55 // pred_check
          %p832 = pneg %p356
        $region70: #{tpu_custom_call.1} parent=55 // pred_check_branch
          %834 = sbr.rel (%p832) target = $region72
        $region71: #{tpu_custom_call.1} parent=55 // pred_region
          %s836 = ssub.s32 64, 64
          %837 = vsyncadd %s796, %s836
          %s838 = sadd.s32 %s35, %s36
          %s839 = smul.addr %s34, 4
          %s840 = sadd.s32 %s838, %s839
          %s841 = smul.addr %s840, 64
          %s842 = scalar_lea.hbm %s11, %s841
          %s844 = sshll.u32 %s799, 4
          %s845 = int_to_ptr.vmem [resolvable:$true] %s844
          %847 = dma.vmem_to_hbm [thread:$0]  %s845, 64, %s842, %s796
        $region72: #{tpu_custom_call.1} parent=55 // pred_fallthru
          _
      $region56: #{tpu_custom_call.1} parent=5 // pred_fallthru
        _
      %p848 = scmp.le.s32.totalorder 2, %s24
      // Predicated region
      $region73: #{tpu_custom_call.1} parent=5 // pred_check
        %p849 = pneg %p848
      $region74: #{tpu_custom_call.1} parent=5 // pred_check_branch
        %851 = sbr.rel (%p849) target = $region76
      $region75: #{tpu_custom_call.1} parent=5 // pred_region
        %s852 = ssub.s32 %s24, 2
        // Predicated region
        $region77: #{tpu_custom_call.1} parent=75 // pred_check
          %p853 = pneg %p302
        $region78: #{tpu_custom_call.1} parent=75 // pred_check_branch
          %855 = sbr.rel (%p853) target = $region80
        $region79: #{tpu_custom_call.1} parent=75 // pred_region
          %s856 = sand.u32 %s287, 1
          %s857 = scalar_lea.sflag [#allocation4], %s856
          %s858 = sand.u32 %s287, 1
          %s859 = smul.addr %s858, 4
          %s860 = scalar_lea.vmem [#allocation3], %s859
          %861 = dma.done %s857, 64
        $region80: #{tpu_custom_call.1} parent=75 // pred_fallthru
          _
        // Predicated region
        $region81: #{tpu_custom_call.1} parent=75 // pred_check
          %p862 = pneg %p332
        $region82: #{tpu_custom_call.1} parent=75 // pred_check_branch
          %864 = sbr.rel (%p862) target = $region84
        $region83: #{tpu_custom_call.1} parent=75 // pred_region
          %s865 = sand.u32 %s30, 1
          %s866 = scalar_lea.sflag [#allocation6], %s865
          %s867 = sand.u32 %s317, 1
          %s868 = smul.addr %s867, 4
          %s869 = scalar_lea.vmem [#allocation5], %s868
          %870 = dma.done %s866, 64
        $region84: #{tpu_custom_call.1} parent=75 // pred_fallthru
          _
        // Predicated region
        $region85: #{tpu_custom_call.1} parent=75 // pred_check
          %p871 = pneg %p362
        $region86: #{tpu_custom_call.1} parent=75 // pred_check_branch
          %873 = sbr.rel (%p871) target = $region88
        $region87: #{tpu_custom_call.1} parent=75 // pred_region
          %s874 = sand.u32 %s30, 1
          %s875 = scalar_lea.sflag [#allocation6], %s874
          %s876 = sand.u32 %s347, 1
          %s877 = smul.addr %s876, 4
          %s878 = scalar_lea.vmem [#allocation7], %s877
          %879 = dma.done %s875, 64
        $region88: #{tpu_custom_call.1} parent=75 // pred_fallthru
          _
      $region76: #{tpu_custom_call.1} parent=5 // pred_fallthru
        _
    $region6: #{tpu_custom_call.1} parent=1 // loop_footer
      %s28 = sadd.s32 1, %s24
    $region7: #{tpu_custom_call.1} parent=1 // loop_footer_branch
      %23 = sbr.rel target = $region3
    $region8: #{tpu_custom_call.1} parent=1 // loop_exit
      _
    %880 = vsyncpa [#allocation4], 1
    %s881 = scalar_lea.sflag [#allocation4], 1
    %882 = vsyncpa %s881, 1
    %883 = vsyncpa [#allocation6], 1
    %s884 = scalar_lea.sflag [#allocation6], 1
    %885 = vsyncpa %s884, 1

</llo_original>
